<compile_context>
chip_gen: v7x
topology: tpu7x:2x2x1
jax: 0.10.0
libtpu: 0.0.40
codegen_flags: <defaults>
</compile_context>

<pallas_src>
import functools
import math

import jax
import jax.numpy as jnp
from jax.experimental import pallas as pl
from jax.experimental.pallas import tpu as pltpu

LANE = 128
ROW_TILE = 16            # bf16 packs 16 rows per vreg (sublane-packed)
MAX_BATCH_TILE = 1024    # VMEM safety cap for very large batches


def _round_up(n, m):
    return ((n + m - 1) // m) * m


# ----------------------------------------------------------------------------
# Fused kernel: entire encoder + decoder in one kernel body (unrolled layers).
# ----------------------------------------------------------------------------
def _make_fused_kernel(n_layers, n_enc, d_out, d_latent):
    def kernel(x_ref, *args):
        wb_refs = args[: 2 * n_layers]
        out_ref = args[2 * n_layers]
        lat_ref = args[2 * n_layers + 1]

        # f32 -> bf16 cast folded into the kernel (no wrapper-side pass).
        h = x_ref[...].astype(jnp.bfloat16)                  # (BT, Din_pad)
        for i in range(n_layers):                            # unrolled at trace time
            w = wb_refs[2 * i][...]                          # (K_pad, N_pad) bf16
            b = wb_refs[2 * i + 1][...]                      # (1, N_pad)  f32
            y = jnp.dot(h, w, preferred_element_type=jnp.float32) + b
            y = jnp.maximum(y, 0.0)                          # ReLU (block = Linear+ReLU)
            if i == n_enc - 1:                               # encoder output = latent
                lat_ref[...] = y[:, :d_latent].astype(lat_ref.dtype)
            if i == n_layers - 1:
                out_ref[...] = y[:, :d_out].astype(out_ref.dtype)
            else:
                h = y.astype(jnp.bfloat16)                   # stays in VMEM

    return kernel


# ----------------------------------------------------------------------------
# Parameter construction (mirrors nn.Linear init ranges and the torch
# AutoEncoder.__init__ layer bookkeeping).
# ----------------------------------------------------------------------------
def _init_linear(key, fan_in, fan_out):
    kw, kb = jax.random.split(key)
    bound = 1.0 / math.sqrt(fan_in)
    # stored as (in, out) — transpose of PyTorch's (out, in)
    w = jax.random.uniform(kw, (fan_in, fan_out), jnp.float32, -bound, bound)
    b = jax.random.uniform(kb, (fan_out,), jnp.float32, -bound, bound)
    return w, b


def build_autoencoder_params(key, layer_size_list, in_channels, input_size):
    layer_size_list = list(layer_size_list)

    enc_params = []
    prev_size = in_channels * input_size
    for size in layer_size_list:
        key, sub = jax.random.split(key)
        enc_params.append(_init_linear(sub, prev_size, size))
        prev_size = size

    # NOTE: the torch code reverses layer_size_list in place.
    layer_size_list.reverse()
    dec_params = []
    for size in layer_size_list[1:]:
        key, sub = jax.random.split(key)
        dec_params.append(_init_linear(sub, prev_size, size))
        prev_size = size
    key, sub = jax.random.split(key)
    dec_params.append(_init_linear(sub, prev_size, in_channels * input_size))

    return enc_params, dec_params


def pad_and_cast_params(enc_params, dec_params, d_in):
    """Zero-pad every layer width to a multiple of 128 lanes, cast weights
    to bf16 (biases stay f32).  Padding is numerically inert."""
    params = list(enc_params) + list(dec_params)
    padded = []
    prev, prev_pad = d_in, _round_up(d_in, LANE)
    for w, b in params:
        k, n = w.shape
        assert k == prev
        n_pad = _round_up(n, LANE)
        wp = jnp.zeros((prev_pad, n_pad), jnp.bfloat16).at[:k, :n].set(
            w.astype(jnp.bfloat16))
        bp = jnp.zeros((1, n_pad), jnp.float32).at[0, :n].set(b)
        padded.append((wp, bp))
        prev, prev_pad = n, n_pad
    return tuple(padded)


def _num_batch_tiles():
    """2 tiles on v7x (2 TensorCores/chip), otherwise 1 (single-TC chips gain
    nothing from a multi-step grid at this kernel size)."""
    try:
        kind = jax.devices()[0].device_kind.lower()
        return 2 if "v7" in kind else 1
    except Exception:
        return 1


# ----------------------------------------------------------------------------
# Forward pass (matches AutoEncoder.forward: returns (reconstruction, latent))
# ----------------------------------------------------------------------------
@functools.partial(
    jax.jit,
    static_argnames=("in_channels", "input_size", "latent_size", "n_enc", "batch_tile"),
)
def autoencoder_forward(x, padded_wb, *, in_channels, input_size, latent_size,
                        n_enc, batch_tile=None):
    n_layers = len(padded_wb)
    d_in = in_channels * input_size
    d_in_pad = padded_wb[0][0].shape[0]

    B = x.shape[0]
    x_flat = x.reshape(B, -1)                                 # x.reshape(x.size(0), -1)
    if d_in_pad != d_in:                                      # no-op when d_in % 128 == 0
        x_flat = jnp.pad(x_flat, ((0, 0), (0, d_in_pad - d_in)))

    # --- Batch tiling: 1 tile (v5e/v6e) or 2 tiles (v7x), rows rounded to 16.
    if batch_tile is None:
        bt = _round_up(pl.cdiv(B, _num_batch_tiles()), ROW_TILE)
        bt = min(bt, MAX_BATCH_TILE)
    else:
        bt = _round_up(min(batch_tile, _round_up(B, ROW_TILE)), ROW_TILE)
    num_tiles = pl.cdiv(B, bt)
    b_pad = num_tiles * bt
    if b_pad != B:                                            # no-op when bt divides B
        x_flat = jnp.pad(x_flat, ((0, b_pad - B), (0, 0)))

    in_specs = [pl.BlockSpec((bt, d_in_pad), lambda i: (i, 0))]
    flat_args = [x_flat]
    for w, b in padded_wb:
        # Constant index_map: weights/biases fetched once, resident across tiles.
        in_specs.append(pl.BlockSpec(w.shape, lambda i: (0, 0)))
        in_specs.append(pl.BlockSpec(b.shape, lambda i: (0, 0)))
        flat_args += [w, b]

    # Advisory cost estimate so XLA schedules surrounding ops sensibly.
    flops = 2 * b_pad * sum(int(w.shape[0]) * int(w.shape[1]) for w, _ in padded_wb)
    bytes_accessed = (
        x_flat.size * x_flat.dtype.itemsize
        + sum(w.size * w.dtype.itemsize + b.size * b.dtype.itemsize
              for w, b in padded_wb)
        + b_pad * d_in * 2 + b_pad * latent_size * 2          # bf16 outputs
    )
    cost = pl.CostEstimate(flops=flops, transcendentals=0,
                           bytes_accessed=bytes_accessed)

    out, lat = pl.pallas_call(
        _make_fused_kernel(n_layers, n_enc, d_in, latent_size),
        grid=(num_tiles,),
        in_specs=in_specs,
        out_specs=[
            # Reconstruction: lane-dense when d_in % 128 == 0 (demo: 256).
            pl.BlockSpec((bt, d_in), lambda i: (i, 0)),
            # Latent emitted at true width (block = full last dim is allowed);
            # avoids a wrapper-side slice copy.
            pl.BlockSpec((bt, latent_size), lambda i: (i, 0)),
        ],
        out_shape=[
            jax.ShapeDtypeStruct((b_pad, d_in), jnp.bfloat16),
            jax.ShapeDtypeStruct((b_pad, latent_size), jnp.bfloat16),
        ],
        cost_estimate=cost,
        compiler_params=pltpu.CompilerParams(
            dimension_semantics=("parallel",),
        ),
    )(*flat_args)

    if b_pad != B:                                            # no-op when bt divides B
        out = out[:B]
        lat = lat[:B]
    out = out.reshape(-1, in_channels, input_size)
    return out, lat


# ----------------------------------------------------------------------------
if __name__ == "__main__":
    # Small, TPU-friendly shapes consistent with the module's forward.
    B = 512
    in_channels = 2
    input_size = 128                  # flat input = 256
    layer_size_list = [128, 64]       # encoder: 256->128->64, decoder: 64->128->256

    key = jax.random.PRNGKey(0)
    key_x, key_p = jax.random.split(key)

    x = jax.random.normal(key_x, (B, in_channels, input_size), jnp.float32)
    enc_params, dec_params = build_autoencoder_params(
        key_p, layer_size_list, in_channels, input_size
    )
    n_enc = len(enc_params)
    latent_size = layer_size_list[-1]

    padded_wb = pad_and_cast_params(enc_params, dec_params, in_channels * input_size)

    out, latent = autoencoder_forward(
        x, padded_wb,
        in_channels=in_channels, input_size=input_size,
        latent_size=latent_size, n_enc=n_enc,
    )
    out = jax.block_until_ready(out)
    latent = jax.block_until_ready(latent)

    assert out.shape == (B, in_channels, input_size), out.shape
    assert latent.shape == (B, latent_size), latent.shape

    # Pure-JAX reference using the same bf16-storage / f32-accumulation math
    # and bf16 outputs.
    def ref_forward(x):
        h = x.reshape(x.shape[0], -1).astype(jnp.bfloat16)
        lat = None
        params = list(enc_params) + list(dec_params)
        for li, (w, b) in enumerate(params):
            y = jnp.dot(h, w.astype(jnp.bfloat16),
                        preferred_element_type=jnp.float32) + b[None, :]
            y = jnp.maximum(y, 0.0)
            if li == n_enc - 1:
                lat = y.astype(jnp.bfloat16)
            h = y.astype(jnp.bfloat16)
        return h.reshape(-1, in_channels, input_size), lat

    ref_out, ref_lat = ref_forward(x)
    err_out = float(jnp.max(jnp.abs(out.astype(jnp.float32) -
                                    ref_out.astype(jnp.float32))))
    err_lat = float(jnp.max(jnp.abs(latent.astype(jnp.float32) -
                                    ref_lat.astype(jnp.float32))))
    assert err_out < 2e-2, err_out
    assert err_lat < 2e-2, err_lat

    print("KERNEL_OK")
</pallas_src>

<mosaic_0001>
module attributes {stable_mosaic.version = 11 : i64} {
  func.func @kernel(%arg0: i32, %arg1: memref<512x256xf32, #tpu.memory_space<vmem>>, %arg2: memref<256x128xbf16, #tpu.memory_space<vmem>>, %arg3: memref<1x128xf32, #tpu.memory_space<vmem>>, %arg4: memref<128x128xbf16, #tpu.memory_space<vmem>>, %arg5: memref<1x128xf32, #tpu.memory_space<vmem>>, %arg6: memref<128x128xbf16, #tpu.memory_space<vmem>>, %arg7: memref<1x128xf32, #tpu.memory_space<vmem>>, %arg8: memref<128x256xbf16, #tpu.memory_space<vmem>>, %arg9: memref<1x256xf32, #tpu.memory_space<vmem>>, %arg10: memref<512x256xbf16, #tpu.memory_space<vmem>>, %arg11: memref<512x64xbf16, #tpu.memory_space<vmem>>) attributes {dimension_semantics = [#tpu.dimension_semantics<parallel>], iteration_bounds = array<i64: 1>, scalar_prefetch = 0 : i64, scratch_operands = 0 : i64, tpu.core_type = #tpu.core_type<tc>, window_params = [{transform_indices = @transform_0, window_bounds = array<i64: 512, 256>}, {pipeline_mode = #tpu.pipeline_mode<synchronous>, transform_indices = @transform_1, window_bounds = array<i64: 256, 128>}, {pipeline_mode = #tpu.pipeline_mode<synchronous>, transform_indices = @transform_2, window_bounds = array<i64: 1, 128>}, {pipeline_mode = #tpu.pipeline_mode<synchronous>, transform_indices = @transform_3, window_bounds = array<i64: 128, 128>}, {pipeline_mode = #tpu.pipeline_mode<synchronous>, transform_indices = @transform_4, window_bounds = array<i64: 1, 128>}, {pipeline_mode = #tpu.pipeline_mode<synchronous>, transform_indices = @transform_5, window_bounds = array<i64: 128, 128>}, {pipeline_mode = #tpu.pipeline_mode<synchronous>, transform_indices = @transform_6, window_bounds = array<i64: 1, 128>}, {pipeline_mode = #tpu.pipeline_mode<synchronous>, transform_indices = @transform_7, window_bounds = array<i64: 128, 256>}, {pipeline_mode = #tpu.pipeline_mode<synchronous>, transform_indices = @transform_8, window_bounds = array<i64: 1, 256>}, {transform_indices = @transform_9, window_bounds = array<i64: 512, 256>}, {transform_indices = @transform_10, window_bounds = array<i64: 512, 64>}]} {
    %c0 = arith.constant 0 : index
    %c0_0 = arith.constant 0 : index
    %0 = vector.load %arg1[%c0, %c0_0] : memref<512x256xf32, #tpu.memory_space<vmem>>, vector<512x256xf32>
    %1 = arith.truncf %0 : vector<512x256xf32> to vector<512x256xbf16>
    %c0_1 = arith.constant 0 : index
    %c0_2 = arith.constant 0 : index
    %2 = vector.load %arg2[%c0_1, %c0_2] : memref<256x128xbf16, #tpu.memory_space<vmem>>, vector<256x128xbf16>
    %c0_3 = arith.constant 0 : index
    %c0_4 = arith.constant 0 : index
    %3 = vector.load %arg3[%c0_3, %c0_4] : memref<1x128xf32, #tpu.memory_space<vmem>>, vector<1x128xf32>
    %cst = arith.constant dense<0.000000e+00> : vector<512x128xf32>
    %4 = tpu.matmul %1, %2, %cst {dimension_numbers = #tpu.dot_dimension_numbers<[1], [0], [0], [1], [0, 0, 1, 1], [], []>} : vector<512x256xbf16>, vector<256x128xbf16>, vector<512x128xf32> -> vector<512x128xf32>
    %5 = vector.broadcast %3 : vector<1x128xf32> to vector<512x128xf32>
    %6 = arith.addf %4, %5 : vector<512x128xf32>
    %cst_5 = arith.constant 0.000000e+00 : f32
    %7 = vector.broadcast %cst_5 : f32 to vector<512x128xf32>
    %8 = arith.maximumf %6, %7 : vector<512x128xf32>
    %9 = arith.truncf %8 : vector<512x128xf32> to vector<512x128xbf16>
    %c0_6 = arith.constant 0 : index
    %c0_7 = arith.constant 0 : index
    %10 = vector.load %arg4[%c0_6, %c0_7] : memref<128x128xbf16, #tpu.memory_space<vmem>>, vector<128x128xbf16>
    %c0_8 = arith.constant 0 : index
    %c0_9 = arith.constant 0 : index
    %11 = vector.load %arg5[%c0_8, %c0_9] : memref<1x128xf32, #tpu.memory_space<vmem>>, vector<1x128xf32>
    %cst_10 = arith.constant dense<0.000000e+00> : vector<512x128xf32>
    %12 = tpu.matmul %9, %10, %cst_10 {dimension_numbers = #tpu.dot_dimension_numbers<[1], [0], [0], [1], [0, 0, 1, 1], [], []>} : vector<512x128xbf16>, vector<128x128xbf16>, vector<512x128xf32> -> vector<512x128xf32>
    %13 = vector.broadcast %11 : vector<1x128xf32> to vector<512x128xf32>
    %14 = arith.addf %12, %13 : vector<512x128xf32>
    %cst_11 = arith.constant 0.000000e+00 : f32
    %15 = vector.broadcast %cst_11 : f32 to vector<512x128xf32>
    %16 = arith.maximumf %14, %15 : vector<512x128xf32>
    %17 = vector.extract_strided_slice %16 {offsets = [0, 0], sizes = [512, 64], strides = [1, 1]} : vector<512x128xf32> to vector<512x64xf32>
    %18 = arith.truncf %17 : vector<512x64xf32> to vector<512x64xbf16>
    %c0_12 = arith.constant 0 : index
    %c0_13 = arith.constant 0 : index
    %19 = vector.load %arg11[%c0_12, %c0_13] : memref<512x64xbf16, #tpu.memory_space<vmem>>, vector<512x64xbf16>
    tpu.vector_store %arg11[%c0_12, %c0_13], %18 {strides = array<i32>} : memref<512x64xbf16, #tpu.memory_space<vmem>>, vector<512x64xbf16>,
    %20 = arith.truncf %16 : vector<512x128xf32> to vector<512x128xbf16>
    %c0_14 = arith.constant 0 : index
    %c0_15 = arith.constant 0 : index
    %21 = vector.load %arg6[%c0_14, %c0_15] : memref<128x128xbf16, #tpu.memory_space<vmem>>, vector<128x128xbf16>
    %c0_16 = arith.constant 0 : index
    %c0_17 = arith.constant 0 : index
    %22 = vector.load %arg7[%c0_16, %c0_17] : memref<1x128xf32, #tpu.memory_space<vmem>>, vector<1x128xf32>
    %cst_18 = arith.constant dense<0.000000e+00> : vector<512x128xf32>
    %23 = tpu.matmul %20, %21, %cst_18 {dimension_numbers = #tpu.dot_dimension_numbers<[1], [0], [0], [1], [0, 0, 1, 1], [], []>} : vector<512x128xbf16>, vector<128x128xbf16>, vector<512x128xf32> -> vector<512x128xf32>
    %24 = vector.broadcast %22 : vector<1x128xf32> to vector<512x128xf32>
    %25 = arith.addf %23, %24 : vector<512x128xf32>
    %cst_19 = arith.constant 0.000000e+00 : f32
    %26 = vector.broadcast %cst_19 : f32 to vector<512x128xf32>
    %27 = arith.maximumf %25, %26 : vector<512x128xf32>
    %28 = arith.truncf %27 : vector<512x128xf32> to vector<512x128xbf16>
    %c0_20 = arith.constant 0 : index
    %c0_21 = arith.constant 0 : index
    %29 = vector.load %arg8[%c0_20, %c0_21] : memref<128x256xbf16, #tpu.memory_space<vmem>>, vector<128x256xbf16>
    %c0_22 = arith.constant 0 : index
    %c0_23 = arith.constant 0 : index
    %30 = vector.load %arg9[%c0_22, %c0_23] : memref<1x256xf32, #tpu.memory_space<vmem>>, vector<1x256xf32>
    %cst_24 = arith.constant dense<0.000000e+00> : vector<512x256xf32>
    %31 = tpu.matmul %28, %29, %cst_24 {dimension_numbers = #tpu.dot_dimension_numbers<[1], [0], [0], [1], [0, 0, 1, 1], [], []>} : vector<512x128xbf16>, vector<128x256xbf16>, vector<512x256xf32> -> vector<512x256xf32>
    %32 = vector.broadcast %30 : vector<1x256xf32> to vector<512x256xf32>
    %33 = arith.addf %31, %32 : vector<512x256xf32>
    %cst_25 = arith.constant 0.000000e+00 : f32
    %34 = vector.broadcast %cst_25 : f32 to vector<512x256xf32>
    %35 = arith.maximumf %33, %34 : vector<512x256xf32>
    %36 = arith.truncf %35 : vector<512x256xf32> to vector<512x256xbf16>
    %c0_26 = arith.constant 0 : index
    %c0_27 = arith.constant 0 : index
    %37 = vector.load %arg10[%c0_26, %c0_27] : memref<512x256xbf16, #tpu.memory_space<vmem>>, vector<512x256xbf16>
    tpu.vector_store %arg10[%c0_26, %c0_27], %36 {strides = array<i32>} : memref<512x256xbf16, #tpu.memory_space<vmem>>, vector<512x256xbf16>,
    return
  }
  func.func @transform_0(%arg0: i32) -> (i32, i32) {
    %c0_i32 = arith.constant 0 : i32
    %c0_i32_0 = arith.constant 0 : i32
    return %arg0, %c0_i32 : i32, i32
  }
  func.func @transform_1(%arg0: i32) -> (i32, i32) {
    %c0_i32 = arith.constant 0 : i32
    %c0_i32_0 = arith.constant 0 : i32
    %c0_i32_1 = arith.constant 0 : i32
    return %c0_i32, %c0_i32_0 : i32, i32
  }
  func.func @transform_2(%arg0: i32) -> (i32, i32) {
    %c0_i32 = arith.constant 0 : i32
    %c0_i32_0 = arith.constant 0 : i32
    %c0_i32_1 = arith.constant 0 : i32
    return %c0_i32, %c0_i32_0 : i32, i32
  }
  func.func @transform_3(%arg0: i32) -> (i32, i32) {
    %c0_i32 = arith.constant 0 : i32
    %c0_i32_0 = arith.constant 0 : i32
    %c0_i32_1 = arith.constant 0 : i32
    return %c0_i32, %c0_i32_0 : i32, i32
  }
  func.func @transform_4(%arg0: i32) -> (i32, i32) {
    %c0_i32 = arith.constant 0 : i32
    %c0_i32_0 = arith.constant 0 : i32
    %c0_i32_1 = arith.constant 0 : i32
    return %c0_i32, %c0_i32_0 : i32, i32
  }
  func.func @transform_5(%arg0: i32) -> (i32, i32) {
    %c0_i32 = arith.constant 0 : i32
    %c0_i32_0 = arith.constant 0 : i32
    %c0_i32_1 = arith.constant 0 : i32
    return %c0_i32, %c0_i32_0 : i32, i32
  }
  func.func @transform_6(%arg0: i32) -> (i32, i32) {
    %c0_i32 = arith.constant 0 : i32
    %c0_i32_0 = arith.constant 0 : i32
    %c0_i32_1 = arith.constant 0 : i32
    return %c0_i32, %c0_i32_0 : i32, i32
  }
  func.func @transform_7(%arg0: i32) -> (i32, i32) {
    %c0_i32 = arith.constant 0 : i32
    %c0_i32_0 = arith.constant 0 : i32
    %c0_i32_1 = arith.constant 0 : i32
    return %c0_i32, %c0_i32_0 : i32, i32
  }
  func.func @transform_8(%arg0: i32) -> (i32, i32) {
    %c0_i32 = arith.constant 0 : i32
    %c0_i32_0 = arith.constant 0 : i32
    %c0_i32_1 = arith.constant 0 : i32
    return %c0_i32, %c0_i32_0 : i32, i32
  }
  func.func @transform_9(%arg0: i32) -> (i32, i32) {
    %c0_i32 = arith.constant 0 : i32
    %c0_i32_0 = arith.constant 0 : i32
    return %arg0, %c0_i32 : i32, i32
  }
  func.func @transform_10(%arg0: i32) -> (i32, i32) {
    %c0_i32 = arith.constant 0 : i32
    %c0_i32_0 = arith.constant 0 : i32
    return %arg0, %c0_i32 : i32, i32
  }
}

</mosaic_0001>

<llo_original>
// kernel: autoencoder_forward.1
$region0: #{autoencoder_forward.1}
  #allocation0 [shape = 'u32[]', space=smem, size = 0x4, offset = 0x4, fixed_abs, tag = 'smem constant byte address 0x4 - core index']
  #allocation1 [shape = 'u32[144,128]{1,0:T(1,128)}', space=vmem, size = 0x12000, scoped, tag = 'internal scratch']
  %s0 = inlined_call_operand.vmem [shape: f32[512,256], index: 0, kind: input, shape index: {}]
  %s1 = inlined_call_operand.vmem [shape: bf16[256,128], index: 1, kind: input, shape index: {}]
  %s2 = inlined_call_operand.vmem [shape: f32[1,128], index: 2, kind: input, shape index: {}]
  %s3 = inlined_call_operand.vmem [shape: bf16[128,128], index: 3, kind: input, shape index: {}]
  %s4 = inlined_call_operand.vmem [shape: f32[1,128], index: 4, kind: input, shape index: {}]
  %s5 = inlined_call_operand.vmem [shape: bf16[128,128], index: 5, kind: input, shape index: {}]
  %s6 = inlined_call_operand.vmem [shape: f32[1,128], index: 6, kind: input, shape index: {}]
  %s7 = inlined_call_operand.vmem [shape: bf16[128,256], index: 7, kind: input, shape index: {}]
  %s8 = inlined_call_operand.vmem [shape: f32[1,256], index: 8, kind: input, shape index: {}]
  %s9 = inlined_call_operand.vmem [shape: bf16[512,256], index: 9, kind: output, shape index: {0}]
  %s10 = inlined_call_operand.vmem [shape: bf16[512,64], index: 10, kind: output, shape index: {1}]
  %11 = xla_tuple %s9, %s10
  %s12 = sld [smem:[#allocation0]]
  $region54: #{autoencoder_forward.1} parent=0
    _
  %s14 = ssub.s32 1, %s12
  %s15 = scalar_select 0, %s14, %s12
  // Predicated region
  $region2: #{autoencoder_forward.1} parent=0 // pred_check
    _
  $region3: #{autoencoder_forward.1} parent=0 // pred_check_branch
    %17 = sbr.rel (0) target = $region5
  $region4: #{autoencoder_forward.1} parent=0 // pred_region
    _
  $region5: #{autoencoder_forward.1} parent=0 // pred_fallthru
    _
  // Predicated region
  $region6: #{autoencoder_forward.1} parent=0 // pred_check
    _
  $region7: #{autoencoder_forward.1} parent=0 // pred_check_branch
    %19 = sbr.rel (0) target = $region9
  $region8: #{autoencoder_forward.1} parent=0 // pred_region
    _
  $region9: #{autoencoder_forward.1} parent=0 // pred_fallthru
    _
  // Predicated region
  $region10: #{autoencoder_forward.1} parent=0 // pred_check
    _
  $region11: #{autoencoder_forward.1} parent=0 // pred_check_branch
    %21 = sbr.rel (0) target = $region13
  $region12: #{autoencoder_forward.1} parent=0 // pred_region
    _
  $region13: #{autoencoder_forward.1} parent=0 // pred_fallthru
    _
  // Predicated region
  $region14: #{autoencoder_forward.1} parent=0 // pred_check
    _
  $region15: #{autoencoder_forward.1} parent=0 // pred_check_branch
    %23 = sbr.rel (0) target = $region17
  $region16: #{autoencoder_forward.1} parent=0 // pred_region
    _
  $region17: #{autoencoder_forward.1} parent=0 // pred_fallthru
    _
  // Predicated region
  $region18: #{autoencoder_forward.1} parent=0 // pred_check
    _
  $region19: #{autoencoder_forward.1} parent=0 // pred_check_branch
    %25 = sbr.rel (0) target = $region21
  $region20: #{autoencoder_forward.1} parent=0 // pred_region
    _
  $region21: #{autoencoder_forward.1} parent=0 // pred_fallthru
    _
  // Predicated region
  $region22: #{autoencoder_forward.1} parent=0 // pred_check
    _
  $region23: #{autoencoder_forward.1} parent=0 // pred_check_branch
    %27 = sbr.rel (0) target = $region25
  $region24: #{autoencoder_forward.1} parent=0 // pred_region
    _
  $region25: #{autoencoder_forward.1} parent=0 // pred_fallthru
    _
  // Predicated region
  $region26: #{autoencoder_forward.1} parent=0 // pred_check
    _
  $region27: #{autoencoder_forward.1} parent=0 // pred_check_branch
    %29 = sbr.rel (0) target = $region29
  $region28: #{autoencoder_forward.1} parent=0 // pred_region
    _
  $region29: #{autoencoder_forward.1} parent=0 // pred_fallthru
    _
  // Predicated region
  $region30: #{autoencoder_forward.1} parent=0 // pred_check
    _
  $region31: #{autoencoder_forward.1} parent=0 // pred_check_branch
    %31 = sbr.rel (0) target = $region33
  $region32: #{autoencoder_forward.1} parent=0 // pred_region
    _
  $region33: #{autoencoder_forward.1} parent=0 // pred_fallthru
    _
  // Predicated region
  $region34: #{autoencoder_forward.1} parent=0 // pred_check
    _
  $region35: #{autoencoder_forward.1} parent=0 // pred_check_branch
    %33 = sbr.rel (0) target = $region37
  $region36: #{autoencoder_forward.1} parent=0 // pred_region
    _
  $region37: #{autoencoder_forward.1} parent=0 // pred_fallthru
    _
  %v35 = vld [vmem:[%s0] sm:$0xff]
  %v36 = vld [vmem:[%s0 + $0x8] sm:$0xff]
  %v37 = vld [vmem:[%s0 + $0x10] sm:$0xff]
  %v38 = vld [vmem:[%s0 + $0x18] sm:$0xff]
  %v39 = vld [vmem:[%s0 + $0x20] sm:$0xff]
  %v40 = vld [vmem:[%s0 + $0x28] sm:$0xff]
  %v41 = vld [vmem:[%s0 + $0x30] sm:$0xff]
  %v42 = vld [vmem:[%s0 + $0x38] sm:$0xff]
  %v43 = vld [vmem:[%s0 + $0x40] sm:$0xff]
  %v44 = vld [vmem:[%s0 + $0x48] sm:$0xff]
  %v45 = vld [vmem:[%s0 + $0x50] sm:$0xff]
  %v46 = vld [vmem:[%s0 + $0x58] sm:$0xff]
  %v47 = vld [vmem:[%s0 + $0x60] sm:$0xff]
  %v48 = vld [vmem:[%s0 + $0x68] sm:$0xff]
  %v49 = vld [vmem:[%s0 + $0x70] sm:$0xff]
  %v50 = vld [vmem:[%s0 + $0x78] sm:$0xff]
  %v51 = vld [vmem:[%s0 + $0x80] sm:$0xff]
  %v52 = vld [vmem:[%s0 + $0x88] sm:$0xff]
  %v53 = vld [vmem:[%s0 + $0x90] sm:$0xff]
  %v54 = vld [vmem:[%s0 + $0x98] sm:$0xff]
  %v55 = vld [vmem:[%s0 + $0xa0] sm:$0xff]
  %v56 = vld [vmem:[%s0 + $0xa8] sm:$0xff]
  %v57 = vld [vmem:[%s0 + $0xb0] sm:$0xff]
  %v58 = vld [vmem:[%s0 + $0xb8] sm:$0xff]
  %v59 = vld [vmem:[%s0 + $0xc0] sm:$0xff]
  %v60 = vld [vmem:[%s0 + $0xc8] sm:$0xff]
  %v61 = vld [vmem:[%s0 + $0xd0] sm:$0xff]
  %v62 = vld [vmem:[%s0 + $0xd8] sm:$0xff]
  %v63 = vld [vmem:[%s0 + $0xe0] sm:$0xff]
  %v64 = vld [vmem:[%s0 + $0xe8] sm:$0xff]
  %v65 = vld [vmem:[%s0 + $0xf0] sm:$0xff]
  %v66 = vld [vmem:[%s0 + $0xf8] sm:$0xff]
  %v67 = vld [vmem:[%s0 + $0x100] sm:$0xff]
  %v68 = vld [vmem:[%s0 + $0x108] sm:$0xff]
  %v69 = vld [vmem:[%s0 + $0x110] sm:$0xff]
  %v70 = vld [vmem:[%s0 + $0x118] sm:$0xff]
  %v71 = vld [vmem:[%s0 + $0x120] sm:$0xff]
  %v72 = vld [vmem:[%s0 + $0x128] sm:$0xff]
  %v73 = vld [vmem:[%s0 + $0x130] sm:$0xff]
  %v74 = vld [vmem:[%s0 + $0x138] sm:$0xff]
  %v75 = vld [vmem:[%s0 + $0x140] sm:$0xff]
  %v76 = vld [vmem:[%s0 + $0x148] sm:$0xff]
  %v77 = vld [vmem:[%s0 + $0x150] sm:$0xff]
  %v78 = vld [vmem:[%s0 + $0x158] sm:$0xff]
  %v79 = vld [vmem:[%s0 + $0x160] sm:$0xff]
  %v80 = vld [vmem:[%s0 + $0x168] sm:$0xff]
  %v81 = vld [vmem:[%s0 + $0x170] sm:$0xff]
  %v82 = vld [vmem:[%s0 + $0x178] sm:$0xff]
  %v83 = vld [vmem:[%s0 + $0x180] sm:$0xff]
  %v84 = vld [vmem:[%s0 + $0x188] sm:$0xff]
  %v85 = vld [vmem:[%s0 + $0x190] sm:$0xff]
  %v86 = vld [vmem:[%s0 + $0x198] sm:$0xff]
  %v87 = vld [vmem:[%s0 + $0x1a0] sm:$0xff]
  %v88 = vld [vmem:[%s0 + $0x1a8] sm:$0xff]
  %v89 = vld [vmem:[%s0 + $0x1b0] sm:$0xff]
  %v90 = vld [vmem:[%s0 + $0x1b8] sm:$0xff]
  %v91 = vld [vmem:[%s0 + $0x1c0] sm:$0xff]
  %v92 = vld [vmem:[%s0 + $0x1c8] sm:$0xff]
  %v93 = vld [vmem:[%s0 + $0x1d0] sm:$0xff]
  %v94 = vld [vmem:[%s0 + $0x1d8] sm:$0xff]
  %v95 = vld [vmem:[%s0 + $0x1e0] sm:$0xff]
  %v96 = vld [vmem:[%s0 + $0x1e8] sm:$0xff]
  %v97 = vld [vmem:[%s0 + $0x1f0] sm:$0xff]
  %v98 = vld [vmem:[%s0 + $0x1f8] sm:$0xff]
  %v99 = vld [vmem:[%s0 + $0x200] sm:$0xff]
  %v100 = vld [vmem:[%s0 + $0x208] sm:$0xff]
  %v101 = vld [vmem:[%s0 + $0x210] sm:$0xff]
  %v102 = vld [vmem:[%s0 + $0x218] sm:$0xff]
  %v103 = vld [vmem:[%s0 + $0x220] sm:$0xff]
  %v104 = vld [vmem:[%s0 + $0x228] sm:$0xff]
  %v105 = vld [vmem:[%s0 + $0x230] sm:$0xff]
  %v106 = vld [vmem:[%s0 + $0x238] sm:$0xff]
  %v107 = vld [vmem:[%s0 + $0x240] sm:$0xff]
  %v108 = vld [vmem:[%s0 + $0x248] sm:$0xff]
  %v109 = vld [vmem:[%s0 + $0x250] sm:$0xff]
  %v110 = vld [vmem:[%s0 + $0x258] sm:$0xff]
  %v111 = vld [vmem:[%s0 + $0x260] sm:$0xff]
  %v112 = vld [vmem:[%s0 + $0x268] sm:$0xff]
  %v113 = vld [vmem:[%s0 + $0x270] sm:$0xff]
  %v114 = vld [vmem:[%s0 + $0x278] sm:$0xff]
  %v115 = vld [vmem:[%s0 + $0x280] sm:$0xff]
  %v116 = vld [vmem:[%s0 + $0x288] sm:$0xff]
  %v117 = vld [vmem:[%s0 + $0x290] sm:$0xff]
  %v118 = vld [vmem:[%s0 + $0x298] sm:$0xff]
  %v119 = vld [vmem:[%s0 + $0x2a0] sm:$0xff]
  %v120 = vld [vmem:[%s0 + $0x2a8] sm:$0xff]
  %v121 = vld [vmem:[%s0 + $0x2b0] sm:$0xff]
  %v122 = vld [vmem:[%s0 + $0x2b8] sm:$0xff]
  %v123 = vld [vmem:[%s0 + $0x2c0] sm:$0xff]
  %v124 = vld [vmem:[%s0 + $0x2c8] sm:$0xff]
  %v125 = vld [vmem:[%s0 + $0x2d0] sm:$0xff]
  %v126 = vld [vmem:[%s0 + $0x2d8] sm:$0xff]
  %v127 = vld [vmem:[%s0 + $0x2e0] sm:$0xff]
  %v128 = vld [vmem:[%s0 + $0x2e8] sm:$0xff]
  %v129 = vld [vmem:[%s0 + $0x2f0] sm:$0xff]
  %v130 = vld [vmem:[%s0 + $0x2f8] sm:$0xff]
  %v131 = vld [vmem:[%s0 + $0x300] sm:$0xff]
  %v132 = vld [vmem:[%s0 + $0x308] sm:$0xff]
  %v133 = vld [vmem:[%s0 + $0x310] sm:$0xff]
  %v134 = vld [vmem:[%s0 + $0x318] sm:$0xff]
  %v135 = vld [vmem:[%s0 + $0x320] sm:$0xff]
  %v136 = vld [vmem:[%s0 + $0x328] sm:$0xff]
  %v137 = vld [vmem:[%s0 + $0x330] sm:$0xff]
  %v138 = vld [vmem:[%s0 + $0x338] sm:$0xff]
  %v139 = vld [vmem:[%s0 + $0x340] sm:$0xff]
  %v140 = vld [vmem:[%s0 + $0x348] sm:$0xff]
  %v141 = vld [vmem:[%s0 + $0x350] sm:$0xff]
  %v142 = vld [vmem:[%s0 + $0x358] sm:$0xff]
  %v143 = vld [vmem:[%s0 + $0x360] sm:$0xff]
  %v144 = vld [vmem:[%s0 + $0x368] sm:$0xff]
  %v145 = vld [vmem:[%s0 + $0x370] sm:$0xff]
  %v146 = vld [vmem:[%s0 + $0x378] sm:$0xff]
  %v147 = vld [vmem:[%s0 + $0x380] sm:$0xff]
  %v148 = vld [vmem:[%s0 + $0x388] sm:$0xff]
  %v149 = vld [vmem:[%s0 + $0x390] sm:$0xff]
  %v150 = vld [vmem:[%s0 + $0x398] sm:$0xff]
  %v151 = vld [vmem:[%s0 + $0x3a0] sm:$0xff]
  %v152 = vld [vmem:[%s0 + $0x3a8] sm:$0xff]
  %v153 = vld [vmem:[%s0 + $0x3b0] sm:$0xff]
  %v154 = vld [vmem:[%s0 + $0x3b8] sm:$0xff]
  %v155 = vld [vmem:[%s0 + $0x3c0] sm:$0xff]
  %v156 = vld [vmem:[%s0 + $0x3c8] sm:$0xff]
  %v157 = vld [vmem:[%s0 + $0x3d0] sm:$0xff]
  %v158 = vld [vmem:[%s0 + $0x3d8] sm:$0xff]
  %v159 = vld [vmem:[%s0 + $0x3e0] sm:$0xff]
  %v160 = vld [vmem:[%s0 + $0x3e8] sm:$0xff]
  %v161 = vld [vmem:[%s0 + $0x3f0] sm:$0xff]
  %v162 = vld [vmem:[%s0 + $0x3f8] sm:$0xff]
  %v163 = vpack.c.bf16 %v37, %v35
  %v164 = vpack.c.bf16 %v38, %v36
  %v165 = vpack.c.bf16 %v41, %v39
  %v166 = vpack.c.bf16 %v42, %v40
  %v167 = vpack.c.bf16 %v45, %v43
  %v168 = vpack.c.bf16 %v46, %v44
  %v169 = vpack.c.bf16 %v49, %v47
  %v170 = vpack.c.bf16 %v50, %v48
  %v171 = vpack.c.bf16 %v53, %v51
  %v172 = vpack.c.bf16 %v54, %v52
  %v173 = vpack.c.bf16 %v57, %v55
  %v174 = vpack.c.bf16 %v58, %v56
  %v175 = vpack.c.bf16 %v61, %v59
  %v176 = vpack.c.bf16 %v62, %v60
  %v177 = vpack.c.bf16 %v65, %v63
  %v178 = vpack.c.bf16 %v66, %v64
  %v179 = vpack.c.bf16 %v69, %v67
  %v180 = vpack.c.bf16 %v70, %v68
  %v181 = vpack.c.bf16 %v73, %v71
  %v182 = vpack.c.bf16 %v74, %v72
  %v183 = vpack.c.bf16 %v77, %v75
  %v184 = vpack.c.bf16 %v78, %v76
  %v185 = vpack.c.bf16 %v81, %v79
  %v186 = vpack.c.bf16 %v82, %v80
  %v187 = vpack.c.bf16 %v85, %v83
  %v188 = vpack.c.bf16 %v86, %v84
  %v189 = vpack.c.bf16 %v89, %v87
  %v190 = vpack.c.bf16 %v90, %v88
  %v191 = vpack.c.bf16 %v93, %v91
  %v192 = vpack.c.bf16 %v94, %v92
  %v193 = vpack.c.bf16 %v97, %v95
  %v194 = vpack.c.bf16 %v98, %v96
  %v195 = vpack.c.bf16 %v101, %v99
  %v196 = vpack.c.bf16 %v102, %v100
  %v197 = vpack.c.bf16 %v105, %v103
  %v198 = vpack.c.bf16 %v106, %v104
  %v199 = vpack.c.bf16 %v109, %v107
  %v200 = vpack.c.bf16 %v110, %v108
  %v201 = vpack.c.bf16 %v113, %v111
  %v202 = vpack.c.bf16 %v114, %v112
  %v203 = vpack.c.bf16 %v117, %v115
  %v204 = vpack.c.bf16 %v118, %v116
  %v205 = vpack.c.bf16 %v121, %v119
  %v206 = vpack.c.bf16 %v122, %v120
  %v207 = vpack.c.bf16 %v125, %v123
  %v208 = vpack.c.bf16 %v126, %v124
  %v209 = vpack.c.bf16 %v129, %v127
  %v210 = vpack.c.bf16 %v130, %v128
  %v211 = vpack.c.bf16 %v133, %v131
  %v212 = vpack.c.bf16 %v134, %v132
  %v213 = vpack.c.bf16 %v137, %v135
  %v214 = vpack.c.bf16 %v138, %v136
  %v215 = vpack.c.bf16 %v141, %v139
  %v216 = vpack.c.bf16 %v142, %v140
  %v217 = vpack.c.bf16 %v145, %v143
  %v218 = vpack.c.bf16 %v146, %v144
  %v219 = vpack.c.bf16 %v149, %v147
  %v220 = vpack.c.bf16 %v150, %v148
  %v221 = vpack.c.bf16 %v153, %v151
  %v222 = vpack.c.bf16 %v154, %v152
  %v223 = vpack.c.bf16 %v157, %v155
  %v224 = vpack.c.bf16 %v158, %v156
  %v225 = vpack.c.bf16 %v161, %v159
  %v226 = vpack.c.bf16 %v162, %v160
  %v227 = vld [vmem:[%s1] sm:$0xf]
  %v228 = vld [vmem:[%s1 + $0x4] sm:$0xf]
  %v229 = vld [vmem:[%s1 + $0x8] sm:$0xf]
  %v230 = vld [vmem:[%s1 + $0xc] sm:$0xf]
  %v231 = vld [vmem:[%s1 + $0x10] sm:$0xf]
  %v232 = vld [vmem:[%s1 + $0x14] sm:$0xf]
  %v233 = vld [vmem:[%s1 + $0x18] sm:$0xf]
  %v234 = vld [vmem:[%s1 + $0x1c] sm:$0xf]
  %v235 = vld [vmem:[%s1 + $0x20] sm:$0xf]
  %v236 = vld [vmem:[%s1 + $0x24] sm:$0xf]
  %v237 = vld [vmem:[%s1 + $0x28] sm:$0xf]
  %v238 = vld [vmem:[%s1 + $0x2c] sm:$0xf]
  %v239 = vld [vmem:[%s1 + $0x30] sm:$0xf]
  %v240 = vld [vmem:[%s1 + $0x34] sm:$0xf]
  %v241 = vld [vmem:[%s1 + $0x38] sm:$0xf]
  %v242 = vld [vmem:[%s1 + $0x3c] sm:$0xf]
  %v243 = vld [vmem:[%s1 + $0x40] sm:$0xf]
  %v244 = vld [vmem:[%s1 + $0x44] sm:$0xf]
  %v245 = vld [vmem:[%s1 + $0x48] sm:$0xf]
  %v246 = vld [vmem:[%s1 + $0x4c] sm:$0xf]
  %v247 = vld [vmem:[%s1 + $0x50] sm:$0xf]
  %v248 = vld [vmem:[%s1 + $0x54] sm:$0xf]
  %v249 = vld [vmem:[%s1 + $0x58] sm:$0xf]
  %v250 = vld [vmem:[%s1 + $0x5c] sm:$0xf]
  %v251 = vld [vmem:[%s1 + $0x60] sm:$0xf]
  %v252 = vld [vmem:[%s1 + $0x64] sm:$0xf]
  %v253 = vld [vmem:[%s1 + $0x68] sm:$0xf]
  %v254 = vld [vmem:[%s1 + $0x6c] sm:$0xf]
  %v255 = vld [vmem:[%s1 + $0x70] sm:$0xf]
  %v256 = vld [vmem:[%s1 + $0x74] sm:$0xf]
  %v257 = vld [vmem:[%s1 + $0x78] sm:$0xf]
  %v258 = vld [vmem:[%s1 + $0x7c] sm:$0xf]
  %v259 = vld [vmem:[%s2] sm:$0x1]
  %v261 = vlaneseq
  %v262 = vshrl.u32 %v261, 7
  %v263 = vsub.s32 0, %v262
  %v264 = vrot.slane %v259, %v263
  %v298 = vunpack.c.l.b16 %v227
  %v299 = vunpack.c.l.b16 %v228
  %v300 = vunpack.c.l.b16 %v229
  %v301 = vunpack.c.l.b16 %v230
  %v302 = vunpack.c.l.b16 %v231
  %v303 = vunpack.c.l.b16 %v232
  %v304 = vunpack.c.l.b16 %v233
  %v305 = vunpack.c.l.b16 %v234
  %v306 = vunpack.c.l.b16 %v235
  %v307 = vunpack.c.l.b16 %v236
  %v308 = vunpack.c.l.b16 %v237
  %v309 = vunpack.c.l.b16 %v238
  %v310 = vunpack.c.l.b16 %v239
  %v311 = vunpack.c.l.b16 %v240
  %v312 = vunpack.c.l.b16 %v241
  %v313 = vunpack.c.l.b16 %v242
  %v314 = vunpack.c.l.b16 %v243
  %v315 = vunpack.c.l.b16 %v244
  %v316 = vunpack.c.l.b16 %v245
  %v317 = vunpack.c.l.b16 %v246
  %v318 = vunpack.c.l.b16 %v247
  %v319 = vunpack.c.l.b16 %v248
  %v320 = vunpack.c.l.b16 %v249
  %v321 = vunpack.c.l.b16 %v250
  %v322 = vunpack.c.l.b16 %v251
  %v323 = vunpack.c.l.b16 %v252
  %v324 = vunpack.c.l.b16 %v253
  %v325 = vunpack.c.l.b16 %v254
  %v326 = vunpack.c.l.b16 %v255
  %v327 = vunpack.c.l.b16 %v256
  %v328 = vunpack.c.l.b16 %v257
  %v329 = vunpack.c.l.b16 %v258
  %v330 = vpack.c.b16 %v299, %v298
  %v331 = vpack.c.b16 %v301, %v300
  %v332 = vpack.c.b16 %v303, %v302
  %v333 = vpack.c.b16 %v305, %v304
  %v334 = vpack.c.b16 %v307, %v306
  %v335 = vpack.c.b16 %v309, %v308
  %v336 = vpack.c.b16 %v311, %v310
  %v337 = vpack.c.b16 %v313, %v312
  %v338 = vpack.c.b16 %v315, %v314
  %v339 = vpack.c.b16 %v317, %v316
  %v340 = vpack.c.b16 %v319, %v318
  %v341 = vpack.c.b16 %v321, %v320
  %v342 = vpack.c.b16 %v323, %v322
  %v343 = vpack.c.b16 %v325, %v324
  %v344 = vpack.c.b16 %v327, %v326
  %v345 = vpack.c.b16 %v329, %v328
  %362 = vmatprep.subr.bf16.mxu0 0
  %363 = vmatpush1.bf16.msra.mxu0 %v330
  %364 = vmatprep.subr.bf16.mxu0 0
  %365 = vmatpush1.bf16.msra.mxu0 %v331
  %366 = vmatprep.subr.bf16.mxu0 0
  %367 = vmatpush1.bf16.msra.mxu0 %v332
  %368 = vmatprep.subr.bf16.mxu0 0
  %369 = vmatpush1.bf16.msra.mxu0 %v333
  %370 = vmatprep.subr.bf16.mxu0 0
  %371 = vmatpush1.bf16.msra.mxu0 %v334
  %372 = vmatprep.subr.bf16.mxu0 0
  %373 = vmatpush1.bf16.msra.mxu0 %v335
  %374 = vmatprep.subr.bf16.mxu0 0
  %375 = vmatpush1.bf16.msra.mxu0 %v336
  %376 = vmatprep.subr.bf16.mxu0 0
  %377 = vmatpush1.bf16.msra.mxu0 %v337
  %378 = vmatprep.subr.bf16.mxu0 0
  %379 = vmatpush1.bf16.msra.mxu0 %v338
  %380 = vmatprep.subr.bf16.mxu0 0
  %381 = vmatpush1.bf16.msra.mxu0 %v339
  %382 = vmatprep.subr.bf16.mxu0 0
  %383 = vmatpush1.bf16.msra.mxu0 %v340
  %384 = vmatprep.subr.bf16.mxu0 0
  %385 = vmatpush1.bf16.msra.mxu0 %v341
  %386 = vmatprep.subr.bf16.mxu0 0
  %387 = vmatpush1.bf16.msra.mxu0 %v342
  %388 = vmatprep.subr.bf16.mxu0 0
  %389 = vmatpush1.bf16.msra.mxu0 %v343
  %390 = vmatprep.subr.bf16.mxu0 0
  %391 = vmatpush1.bf16.msra.mxu0 %v344
  %392 = vmatprep.subr.bf16.mxu0 0
  %393 = vmatpush1.bf16.msra.mxu0 %v345
  %394 = vmatprep.mubr.bf16.mxu0 %v164
  %395 = vmatmul.mubr.bf16.gmra.mrb[0].mxu0 %v163
  %v396 = vpop.f32.mrb[0].mxu0
  %v397 = vadd.f32 %v264, %v396
  %v398 = vpop.f32.mrb[0].mxu0
  %v399 = vpop.f32.mrb[0].mxu0
  %v400 = vadd.f32 %v264, %v399
  %v401 = vpop.f32.mrb[0].mxu0
  %402 = vmatprep.mubr.bf16.mxu0 %v166
  %403 = vmatmul.mubr.bf16.gmra.mrb[0].mxu0 %v165
  %v404 = vpop.f32.mrb[0].mxu0
  %v405 = vadd.f32 %v264, %v404
  %v406 = vpop.f32.mrb[0].mxu0
  %v407 = vpop.f32.mrb[0].mxu0
  %v408 = vadd.f32 %v264, %v407
  %v409 = vpop.f32.mrb[0].mxu0
  %410 = vmatprep.mubr.bf16.mxu0 %v168
  %411 = vmatmul.mubr.bf16.gmra.mrb[0].mxu0 %v167
  %v412 = vpop.f32.mrb[0].mxu0
  %v413 = vadd.f32 %v264, %v412
  %v414 = vpop.f32.mrb[0].mxu0
  %v415 = vpop.f32.mrb[0].mxu0
  %v416 = vadd.f32 %v264, %v415
  %v417 = vpop.f32.mrb[0].mxu0
  %418 = vmatprep.mubr.bf16.mxu0 %v170
  %419 = vmatmul.mubr.bf16.gmra.mrb[0].mxu0 %v169
  %v420 = vpop.f32.mrb[0].mxu0
  %v421 = vadd.f32 %v264, %v420
  %v422 = vpop.f32.mrb[0].mxu0
  %v423 = vpop.f32.mrb[0].mxu0
  %v424 = vadd.f32 %v264, %v423
  %v425 = vpop.f32.mrb[0].mxu0
  %426 = vmatprep.mubr.bf16.mxu0 %v172
  %427 = vmatmul.mubr.bf16.gmra.mrb[0].mxu0 %v171
  %v428 = vpop.f32.mrb[0].mxu0
  %v429 = vadd.f32 %v264, %v428
  %v430 = vpop.f32.mrb[0].mxu0
  %v431 = vpop.f32.mrb[0].mxu0
  %v432 = vadd.f32 %v264, %v431
  %v433 = vpop.f32.mrb[0].mxu0
  %434 = vmatprep.mubr.bf16.mxu0 %v174
  %435 = vmatmul.mubr.bf16.gmra.mrb[0].mxu0 %v173
  %v436 = vpop.f32.mrb[0].mxu0
  %v437 = vadd.f32 %v264, %v436
  %v438 = vpop.f32.mrb[0].mxu0
  %v439 = vpop.f32.mrb[0].mxu0
  %v440 = vadd.f32 %v264, %v439
  %v441 = vpop.f32.mrb[0].mxu0
  %442 = vmatprep.mubr.bf16.mxu0 %v176
  %443 = vmatmul.mubr.bf16.gmra.mrb[0].mxu0 %v175
  %v444 = vpop.f32.mrb[0].mxu0
  %v445 = vadd.f32 %v264, %v444
  %v446 = vpop.f32.mrb[0].mxu0
  %v447 = vpop.f32.mrb[0].mxu0
  %v448 = vadd.f32 %v264, %v447
  %v449 = vpop.f32.mrb[0].mxu0
  %450 = vmatprep.mubr.bf16.mxu0 %v178
  %451 = vmatmul.mubr.bf16.gmra.mrb[0].mxu0 %v177
  %v452 = vpop.f32.mrb[0].mxu0
  %v453 = vadd.f32 %v264, %v452
  %v454 = vpop.f32.mrb[0].mxu0
  %v455 = vpop.f32.mrb[0].mxu0
  %v456 = vadd.f32 %v264, %v455
  %v457 = vpop.f32.mrb[0].mxu0
  %458 = vmatprep.mubr.bf16.mxu0 %v180
  %459 = vmatmul.mubr.bf16.gmra.mrb[0].mxu0 %v179
  %v460 = vpop.f32.mrb[0].mxu0
  %v461 = vadd.f32 %v264, %v460
  %v462 = vpop.f32.mrb[0].mxu0
  %v463 = vpop.f32.mrb[0].mxu0
  %v464 = vadd.f32 %v264, %v463
  %v465 = vpop.f32.mrb[0].mxu0
  %466 = vmatprep.mubr.bf16.mxu0 %v182
  %467 = vmatmul.mubr.bf16.gmra.mrb[0].mxu0 %v181
  %v468 = vpop.f32.mrb[0].mxu0
  %v469 = vadd.f32 %v264, %v468
  %v470 = vpop.f32.mrb[0].mxu0
  %v471 = vpop.f32.mrb[0].mxu0
  %v472 = vadd.f32 %v264, %v471
  %v473 = vpop.f32.mrb[0].mxu0
  %474 = vmatprep.mubr.bf16.mxu0 %v184
  %475 = vmatmul.mubr.bf16.gmra.mrb[0].mxu0 %v183
  %v476 = vpop.f32.mrb[0].mxu0
  %v477 = vadd.f32 %v264, %v476
  %v478 = vpop.f32.mrb[0].mxu0
  %v479 = vpop.f32.mrb[0].mxu0
  %v480 = vadd.f32 %v264, %v479
  %v481 = vpop.f32.mrb[0].mxu0
  %482 = vmatprep.mubr.bf16.mxu0 %v186
  %483 = vmatmul.mubr.bf16.gmra.mrb[0].mxu0 %v185
  %v484 = vpop.f32.mrb[0].mxu0
  %v485 = vadd.f32 %v264, %v484
  %v486 = vpop.f32.mrb[0].mxu0
  %v487 = vpop.f32.mrb[0].mxu0
  %v488 = vadd.f32 %v264, %v487
  %v489 = vpop.f32.mrb[0].mxu0
  %490 = vmatprep.mubr.bf16.mxu0 %v188
  %491 = vmatmul.mubr.bf16.gmra.mrb[0].mxu0 %v187
  %v492 = vpop.f32.mrb[0].mxu0
  %v493 = vadd.f32 %v264, %v492
  %v494 = vpop.f32.mrb[0].mxu0
  %v495 = vpop.f32.mrb[0].mxu0
  %v496 = vadd.f32 %v264, %v495
  %v497 = vpop.f32.mrb[0].mxu0
  %498 = vmatprep.mubr.bf16.mxu0 %v190
  %499 = vmatmul.mubr.bf16.gmra.mrb[0].mxu0 %v189
  %v500 = vpop.f32.mrb[0].mxu0
  %v501 = vadd.f32 %v264, %v500
  %v502 = vpop.f32.mrb[0].mxu0
  %v503 = vpop.f32.mrb[0].mxu0
  %v504 = vadd.f32 %v264, %v503
  %v505 = vpop.f32.mrb[0].mxu0
  %506 = vmatprep.mubr.bf16.mxu0 %v192
  %507 = vmatmul.mubr.bf16.gmra.mrb[0].mxu0 %v191
  %v508 = vpop.f32.mrb[0].mxu0
  %v509 = vadd.f32 %v264, %v508
  %v510 = vpop.f32.mrb[0].mxu0
  %v511 = vpop.f32.mrb[0].mxu0
  %v512 = vadd.f32 %v264, %v511
  %v513 = vpop.f32.mrb[0].mxu0
  %514 = vmatprep.mubr.bf16.mxu0 %v194
  %515 = vmatmul.mubr.bf16.gmra.mrb[0].mxu0 %v193
  %v516 = vpop.f32.mrb[0].mxu0
  %v517 = vadd.f32 %v264, %v516
  %v518 = vpop.f32.mrb[0].mxu0
  %v519 = vpop.f32.mrb[0].mxu0
  %v520 = vadd.f32 %v264, %v519
  %v521 = vpop.f32.mrb[0].mxu0
  %522 = vmatprep.mubr.bf16.mxu0 %v196
  %523 = vmatmul.mubr.bf16.gmra.mrb[0].mxu0 %v195
  %v524 = vpop.f32.mrb[0].mxu0
  %v525 = vadd.f32 %v264, %v524
  %v526 = vpop.f32.mrb[0].mxu0
  %v527 = vpop.f32.mrb[0].mxu0
  %v528 = vadd.f32 %v264, %v527
  %v529 = vpop.f32.mrb[0].mxu0
  %530 = vmatprep.mubr.bf16.mxu0 %v198
  %531 = vmatmul.mubr.bf16.gmra.mrb[0].mxu0 %v197
  %v532 = vpop.f32.mrb[0].mxu0
  %v533 = vadd.f32 %v264, %v532
  %v534 = vpop.f32.mrb[0].mxu0
  %v535 = vpop.f32.mrb[0].mxu0
  %v536 = vadd.f32 %v264, %v535
  %v537 = vpop.f32.mrb[0].mxu0
  %538 = vmatprep.mubr.bf16.mxu0 %v200
  %539 = vmatmul.mubr.bf16.gmra.mrb[0].mxu0 %v199
  %v540 = vpop.f32.mrb[0].mxu0
  %v541 = vadd.f32 %v264, %v540
  %v542 = vpop.f32.mrb[0].mxu0
  %v543 = vpop.f32.mrb[0].mxu0
  %v544 = vadd.f32 %v264, %v543
  %v545 = vpop.f32.mrb[0].mxu0
  %546 = vmatprep.mubr.bf16.mxu0 %v202
  %547 = vmatmul.mubr.bf16.gmra.mrb[0].mxu0 %v201
  %v548 = vpop.f32.mrb[0].mxu0
  %v549 = vadd.f32 %v264, %v548
  %v550 = vpop.f32.mrb[0].mxu0
  %v551 = vpop.f32.mrb[0].mxu0
  %v552 = vadd.f32 %v264, %v551
  %v553 = vpop.f32.mrb[0].mxu0
  %554 = vmatprep.mubr.bf16.mxu0 %v204
  %555 = vmatmul.mubr.bf16.gmra.mrb[0].mxu0 %v203
  %v556 = vpop.f32.mrb[0].mxu0
  %v557 = vadd.f32 %v264, %v556
  %v558 = vpop.f32.mrb[0].mxu0
  %v559 = vpop.f32.mrb[0].mxu0
  %v560 = vadd.f32 %v264, %v559
  %v561 = vpop.f32.mrb[0].mxu0
  %562 = vmatprep.mubr.bf16.mxu0 %v206
  %563 = vmatmul.mubr.bf16.gmra.mrb[0].mxu0 %v205
  %v564 = vpop.f32.mrb[0].mxu0
  %v565 = vadd.f32 %v264, %v564
  %v566 = vpop.f32.mrb[0].mxu0
  %v567 = vpop.f32.mrb[0].mxu0
  %v568 = vadd.f32 %v264, %v567
  %v569 = vpop.f32.mrb[0].mxu0
  %570 = vmatprep.mubr.bf16.mxu0 %v208
  %571 = vmatmul.mubr.bf16.gmra.mrb[0].mxu0 %v207
  %v572 = vpop.f32.mrb[0].mxu0
  %v573 = vadd.f32 %v264, %v572
  %v574 = vpop.f32.mrb[0].mxu0
  %v575 = vpop.f32.mrb[0].mxu0
  %v576 = vadd.f32 %v264, %v575
  %v577 = vpop.f32.mrb[0].mxu0
  %578 = vmatprep.mubr.bf16.mxu0 %v210
  %579 = vmatmul.mubr.bf16.gmra.mrb[0].mxu0 %v209
  %v580 = vpop.f32.mrb[0].mxu0
  %v581 = vadd.f32 %v264, %v580
  %v582 = vpop.f32.mrb[0].mxu0
  %v583 = vpop.f32.mrb[0].mxu0
  %v584 = vadd.f32 %v264, %v583
  %v585 = vpop.f32.mrb[0].mxu0
  %586 = vmatprep.mubr.bf16.mxu0 %v212
  %587 = vmatmul.mubr.bf16.gmra.mrb[0].mxu0 %v211
  %v588 = vpop.f32.mrb[0].mxu0
  %v589 = vadd.f32 %v264, %v588
  %v590 = vpop.f32.mrb[0].mxu0
  %v591 = vpop.f32.mrb[0].mxu0
  %v592 = vadd.f32 %v264, %v591
  %v593 = vpop.f32.mrb[0].mxu0
  %594 = vmatprep.mubr.bf16.mxu0 %v214
  %595 = vmatmul.mubr.bf16.gmra.mrb[0].mxu0 %v213
  %v596 = vpop.f32.mrb[0].mxu0
  %v597 = vadd.f32 %v264, %v596
  %v598 = vpop.f32.mrb[0].mxu0
  %v599 = vpop.f32.mrb[0].mxu0
  %v600 = vadd.f32 %v264, %v599
  %v601 = vpop.f32.mrb[0].mxu0
  %602 = vmatprep.mubr.bf16.mxu0 %v216
  %603 = vmatmul.mubr.bf16.gmra.mrb[0].mxu0 %v215
  %v604 = vpop.f32.mrb[0].mxu0
  %v605 = vadd.f32 %v264, %v604
  %v606 = vpop.f32.mrb[0].mxu0
  %v607 = vpop.f32.mrb[0].mxu0
  %v608 = vadd.f32 %v264, %v607
  %v609 = vpop.f32.mrb[0].mxu0
  %610 = vmatprep.mubr.bf16.mxu0 %v218
  %611 = vmatmul.mubr.bf16.gmra.mrb[0].mxu0 %v217
  %v612 = vpop.f32.mrb[0].mxu0
  %v613 = vadd.f32 %v264, %v612
  %v614 = vpop.f32.mrb[0].mxu0
  %v615 = vpop.f32.mrb[0].mxu0
  %v616 = vadd.f32 %v264, %v615
  %v617 = vpop.f32.mrb[0].mxu0
  %618 = vmatprep.mubr.bf16.mxu0 %v220
  %619 = vmatmul.mubr.bf16.gmra.mrb[0].mxu0 %v219
  %v620 = vpop.f32.mrb[0].mxu0
  %v621 = vadd.f32 %v264, %v620
  %v622 = vpop.f32.mrb[0].mxu0
  %v623 = vpop.f32.mrb[0].mxu0
  %v624 = vadd.f32 %v264, %v623
  %v625 = vpop.f32.mrb[0].mxu0
  %626 = vmatprep.mubr.bf16.mxu0 %v222
  %627 = vmatmul.mubr.bf16.gmra.mrb[0].mxu0 %v221
  %v628 = vpop.f32.mrb[0].mxu0
  %v629 = vadd.f32 %v264, %v628
  %v630 = vpop.f32.mrb[0].mxu0
  %v631 = vpop.f32.mrb[0].mxu0
  %v632 = vadd.f32 %v264, %v631
  %v633 = vpop.f32.mrb[0].mxu0
  %634 = vmatprep.mubr.bf16.mxu0 %v224
  %635 = vmatmul.mubr.bf16.gmra.mrb[0].mxu0 %v223
  %v636 = vpop.f32.mrb[0].mxu0
  %v637 = vadd.f32 %v264, %v636
  %v638 = vpop.f32.mrb[0].mxu0
  %v639 = vpop.f32.mrb[0].mxu0
  %v640 = vadd.f32 %v264, %v639
  %v641 = vpop.f32.mrb[0].mxu0
  %642 = vmatprep.mubr.bf16.mxu0 %v226
  %643 = vmatmul.mubr.bf16.gmra.mrb[0].mxu0 %v225
  %v644 = vpop.f32.mrb[0].mxu0
  %v645 = vadd.f32 %v264, %v644
  %v646 = vpop.f32.mrb[0].mxu0
  %v647 = vpop.f32.mrb[0].mxu0
  %v648 = vadd.f32 %v264, %v647
  %v649 = vpop.f32.mrb[0].mxu0
  %650 = vdwg.mxu0
  %v651 = vmax.f32 %v397, 0.0
  %v652 = vmax.f32 %v400, 0.0
  %v653 = vmax.f32 %v405, 0.0
  %v654 = vmax.f32 %v408, 0.0
  %v655 = vmax.f32 %v413, 0.0
  %v656 = vmax.f32 %v416, 0.0
  %v657 = vmax.f32 %v421, 0.0
  %v658 = vmax.f32 %v424, 0.0
  %v659 = vmax.f32 %v429, 0.0
  %v660 = vmax.f32 %v432, 0.0
  %v661 = vmax.f32 %v437, 0.0
  %v662 = vmax.f32 %v440, 0.0
  %v663 = vmax.f32 %v445, 0.0
  %v664 = vmax.f32 %v448, 0.0
  %v665 = vmax.f32 %v453, 0.0
  %v666 = vmax.f32 %v456, 0.0
  %v667 = vmax.f32 %v461, 0.0
  %v668 = vmax.f32 %v464, 0.0
  %v669 = vmax.f32 %v469, 0.0
  %v670 = vmax.f32 %v472, 0.0
  %v671 = vmax.f32 %v477, 0.0
  %v672 = vmax.f32 %v480, 0.0
  %v673 = vmax.f32 %v485, 0.0
  %v674 = vmax.f32 %v488, 0.0
  %v675 = vmax.f32 %v493, 0.0
  %v676 = vmax.f32 %v496, 0.0
  %v677 = vmax.f32 %v501, 0.0
  %v678 = vmax.f32 %v504, 0.0
  %v679 = vmax.f32 %v509, 0.0
  %v680 = vmax.f32 %v512, 0.0
  %v681 = vmax.f32 %v517, 0.0
  %v682 = vmax.f32 %v520, 0.0
  %v683 = vmax.f32 %v525, 0.0
  %v684 = vmax.f32 %v528, 0.0
  %v685 = vmax.f32 %v533, 0.0
  %v686 = vmax.f32 %v536, 0.0
  %v687 = vmax.f32 %v541, 0.0
  %v688 = vmax.f32 %v544, 0.0
  %v689 = vmax.f32 %v549, 0.0
  %v690 = vmax.f32 %v552, 0.0
  %v691 = vmax.f32 %v557, 0.0
  %v692 = vmax.f32 %v560, 0.0
  %v693 = vmax.f32 %v565, 0.0
  %v694 = vmax.f32 %v568, 0.0
  %v695 = vmax.f32 %v573, 0.0
  %v696 = vmax.f32 %v576, 0.0
  %v697 = vmax.f32 %v581, 0.0
  %v698 = vmax.f32 %v584, 0.0
  %v699 = vmax.f32 %v589, 0.0
  %v700 = vmax.f32 %v592, 0.0
  %v701 = vmax.f32 %v597, 0.0
  %v702 = vmax.f32 %v600, 0.0
  %v703 = vmax.f32 %v605, 0.0
  %v704 = vmax.f32 %v608, 0.0
  %v705 = vmax.f32 %v613, 0.0
  %v706 = vmax.f32 %v616, 0.0
  %v707 = vmax.f32 %v621, 0.0
  %v708 = vmax.f32 %v624, 0.0
  %v709 = vmax.f32 %v629, 0.0
  %v710 = vmax.f32 %v632, 0.0
  %v711 = vmax.f32 %v637, 0.0
  %v712 = vmax.f32 %v640, 0.0
  %v713 = vmax.f32 %v645, 0.0
  %v714 = vmax.f32 %v648, 0.0
  %v715 = vpack.c.bf16 %v652, %v651
  %v716 = vpack.c.bf16 %v654, %v653
  %v717 = vpack.c.bf16 %v656, %v655
  %v718 = vpack.c.bf16 %v658, %v657
  %v719 = vpack.c.bf16 %v660, %v659
  %v720 = vpack.c.bf16 %v662, %v661
  %v721 = vpack.c.bf16 %v664, %v663
  %v722 = vpack.c.bf16 %v666, %v665
  %v723 = vpack.c.bf16 %v668, %v667
  %v724 = vpack.c.bf16 %v670, %v669
  %v725 = vpack.c.bf16 %v672, %v671
  %v726 = vpack.c.bf16 %v674, %v673
  %v727 = vpack.c.bf16 %v676, %v675
  %v728 = vpack.c.bf16 %v678, %v677
  %v729 = vpack.c.bf16 %v680, %v679
  %v730 = vpack.c.bf16 %v682, %v681
  %v731 = vpack.c.bf16 %v684, %v683
  %v732 = vpack.c.bf16 %v686, %v685
  %v733 = vpack.c.bf16 %v688, %v687
  %v734 = vpack.c.bf16 %v690, %v689
  %v735 = vpack.c.bf16 %v692, %v691
  %v736 = vpack.c.bf16 %v694, %v693
  %v737 = vpack.c.bf16 %v696, %v695
  %v738 = vpack.c.bf16 %v698, %v697
  %v739 = vpack.c.bf16 %v700, %v699
  %v740 = vpack.c.bf16 %v702, %v701
  %v741 = vpack.c.bf16 %v704, %v703
  %v742 = vpack.c.bf16 %v706, %v705
  %v743 = vpack.c.bf16 %v708, %v707
  %v744 = vpack.c.bf16 %v710, %v709
  %v745 = vpack.c.bf16 %v712, %v711
  %v746 = vpack.c.bf16 %v714, %v713
  %v747 = vld [vmem:[%s3] sm:$0xf]
  %v748 = vld [vmem:[%s3 + $0x4] sm:$0xf]
  %v749 = vld [vmem:[%s3 + $0x8] sm:$0xf]
  %v750 = vld [vmem:[%s3 + $0xc] sm:$0xf]
  %v751 = vld [vmem:[%s3 + $0x10] sm:$0xf]
  %v752 = vld [vmem:[%s3 + $0x14] sm:$0xf]
  %v753 = vld [vmem:[%s3 + $0x18] sm:$0xf]
  %v754 = vld [vmem:[%s3 + $0x1c] sm:$0xf]
  %v755 = vld [vmem:[%s3 + $0x20] sm:$0xf]
  %v756 = vld [vmem:[%s3 + $0x24] sm:$0xf]
  %v757 = vld [vmem:[%s3 + $0x28] sm:$0xf]
  %v758 = vld [vmem:[%s3 + $0x2c] sm:$0xf]
  %v759 = vld [vmem:[%s3 + $0x30] sm:$0xf]
  %v760 = vld [vmem:[%s3 + $0x34] sm:$0xf]
  %v761 = vld [vmem:[%s3 + $0x38] sm:$0xf]
  %v762 = vld [vmem:[%s3 + $0x3c] sm:$0xf]
  %v763 = vld [vmem:[%s4] sm:$0x1]
  %v765 = vlaneseq
  %v766 = vshrl.u32 %v765, 7
  %v767 = vsub.s32 0, %v766
  %v768 = vrot.slane %v763, %v767
  %v786 = vunpack.c.l.b16 %v747
  %v787 = vunpack.c.l.b16 %v748
  %v788 = vunpack.c.l.b16 %v749
  %v789 = vunpack.c.l.b16 %v750
  %v790 = vunpack.c.l.b16 %v751
  %v791 = vunpack.c.l.b16 %v752
  %v792 = vunpack.c.l.b16 %v753
  %v793 = vunpack.c.l.b16 %v754
  %v794 = vunpack.c.l.b16 %v755
  %v795 = vunpack.c.l.b16 %v756
  %v796 = vunpack.c.l.b16 %v757
  %v797 = vunpack.c.l.b16 %v758
  %v798 = vunpack.c.l.b16 %v759
  %v799 = vunpack.c.l.b16 %v760
  %v800 = vunpack.c.l.b16 %v761
  %v801 = vunpack.c.l.b16 %v762
  %v802 = vpack.c.b16 %v787, %v786
  %v803 = vpack.c.b16 %v789, %v788
  %v804 = vpack.c.b16 %v791, %v790
  %v805 = vpack.c.b16 %v793, %v792
  %v806 = vpack.c.b16 %v795, %v794
  %v807 = vpack.c.b16 %v797, %v796
  %v808 = vpack.c.b16 %v799, %v798
  %v809 = vpack.c.b16 %v801, %v800
  %818 = vmatprep.subr.bf16.mxu0 0
  %819 = vmatpush1.bf16.msra.mxu0 %v802
  %820 = vmatprep.subr.bf16.mxu0 0
  %821 = vmatpush1.bf16.msra.mxu0 %v803
  %822 = vmatprep.subr.bf16.mxu0 0
  %823 = vmatpush1.bf16.msra.mxu0 %v804
  %824 = vmatprep.subr.bf16.mxu0 0
  %825 = vmatpush1.bf16.msra.mxu0 %v805
  %826 = vmatprep.subr.bf16.mxu0 0
  %827 = vmatpush1.bf16.msra.mxu0 %v806
  %828 = vmatprep.subr.bf16.mxu0 0
  %829 = vmatpush1.bf16.msra.mxu0 %v807
  %830 = vmatprep.subr.bf16.mxu0 0
  %831 = vmatpush1.bf16.msra.mxu0 %v808
  %832 = vmatprep.subr.bf16.mxu0 0
  %833 = vmatpush1.bf16.msra.mxu0 %v809
  %834 = vmatprep.subr.bf16.mxu0 0
  %835 = vmatpush1.bf16.msra.mxu0 0
  %836 = vmatprep.subr.bf16.mxu0 0
  %837 = vmatpush1.bf16.msra.mxu0 0
  %838 = vmatprep.subr.bf16.mxu0 0
  %839 = vmatpush1.bf16.msra.mxu0 0
  %840 = vmatprep.subr.bf16.mxu0 0
  %841 = vmatpush1.bf16.msra.mxu0 0
  %842 = vmatprep.subr.bf16.mxu0 0
  %843 = vmatpush1.bf16.msra.mxu0 0
  %844 = vmatprep.subr.bf16.mxu0 0
  %845 = vmatpush1.bf16.msra.mxu0 0
  %846 = vmatprep.subr.bf16.mxu0 0
  %847 = vmatpush1.bf16.msra.mxu0 0
  %848 = vmatprep.subr.bf16.mxu0 0
  %849 = vmatpush1.bf16.msra.mxu0 0
  %850 = vmatprep.mubr.bf16.mxu0 0
  %851 = vmatmul.mubr.bf16.gmra.mrb[0].mxu0 %v715
  %v852 = vpop.f32.mrb[0].mxu0
  %v853 = vadd.f32 %v768, %v852
  %v854 = vpop.f32.mrb[0].mxu0
  %v855 = vpop.f32.mrb[0].mxu0
  %v856 = vadd.f32 %v768, %v855
  %v857 = vpop.f32.mrb[0].mxu0
  %858 = vmatprep.mubr.bf16.mxu0 0
  %859 = vmatmul.mubr.bf16.gmra.mrb[0].mxu0 %v716
  %v860 = vpop.f32.mrb[0].mxu0
  %v861 = vadd.f32 %v768, %v860
  %v862 = vpop.f32.mrb[0].mxu0
  %v863 = vpop.f32.mrb[0].mxu0
  %v864 = vadd.f32 %v768, %v863
  %v865 = vpop.f32.mrb[0].mxu0
  %866 = vmatprep.mubr.bf16.mxu0 0
  %867 = vmatmul.mubr.bf16.gmra.mrb[0].mxu0 %v717
  %v868 = vpop.f32.mrb[0].mxu0
  %v869 = vadd.f32 %v768, %v868
  %v870 = vpop.f32.mrb[0].mxu0
  %v871 = vpop.f32.mrb[0].mxu0
  %v872 = vadd.f32 %v768, %v871
  %v873 = vpop.f32.mrb[0].mxu0
  %874 = vmatprep.mubr.bf16.mxu0 0
  %875 = vmatmul.mubr.bf16.gmra.mrb[0].mxu0 %v718
  %v876 = vpop.f32.mrb[0].mxu0
  %v877 = vadd.f32 %v768, %v876
  %v878 = vpop.f32.mrb[0].mxu0
  %v879 = vpop.f32.mrb[0].mxu0
  %v880 = vadd.f32 %v768, %v879
  %v881 = vpop.f32.mrb[0].mxu0
  %882 = vmatprep.mubr.bf16.mxu0 0
  %883 = vmatmul.mubr.bf16.gmra.mrb[0].mxu0 %v719
  %v884 = vpop.f32.mrb[0].mxu0
  %v885 = vadd.f32 %v768, %v884
  %v886 = vpop.f32.mrb[0].mxu0
  %v887 = vpop.f32.mrb[0].mxu0
  %v888 = vadd.f32 %v768, %v887
  %v889 = vpop.f32.mrb[0].mxu0
  %890 = vmatprep.mubr.bf16.mxu0 0
  %891 = vmatmul.mubr.bf16.gmra.mrb[0].mxu0 %v720
  %v892 = vpop.f32.mrb[0].mxu0
  %v893 = vadd.f32 %v768, %v892
  %v894 = vpop.f32.mrb[0].mxu0
  %v895 = vpop.f32.mrb[0].mxu0
  %v896 = vadd.f32 %v768, %v895
  %v897 = vpop.f32.mrb[0].mxu0
  %898 = vmatprep.mubr.bf16.mxu0 0
  %899 = vmatmul.mubr.bf16.gmra.mrb[0].mxu0 %v721
  %v900 = vpop.f32.mrb[0].mxu0
  %v901 = vadd.f32 %v768, %v900
  %v902 = vpop.f32.mrb[0].mxu0
  %v903 = vpop.f32.mrb[0].mxu0
  %v904 = vadd.f32 %v768, %v903
  %v905 = vpop.f32.mrb[0].mxu0
  %906 = vmatprep.mubr.bf16.mxu0 0
  %907 = vmatmul.mubr.bf16.gmra.mrb[0].mxu0 %v722
  %v908 = vpop.f32.mrb[0].mxu0
  %v909 = vadd.f32 %v768, %v908
  %v910 = vpop.f32.mrb[0].mxu0
  %v911 = vpop.f32.mrb[0].mxu0
  %v912 = vadd.f32 %v768, %v911
  %v913 = vpop.f32.mrb[0].mxu0
  %914 = vmatprep.mubr.bf16.mxu0 0
  %915 = vmatmul.mubr.bf16.gmra.mrb[0].mxu0 %v723
  %v916 = vpop.f32.mrb[0].mxu0
  %v917 = vadd.f32 %v768, %v916
  %v918 = vpop.f32.mrb[0].mxu0
  %v919 = vpop.f32.mrb[0].mxu0
  %v920 = vadd.f32 %v768, %v919
  %v921 = vpop.f32.mrb[0].mxu0
  %922 = vmatprep.mubr.bf16.mxu0 0
  %923 = vmatmul.mubr.bf16.gmra.mrb[0].mxu0 %v724
  %v924 = vpop.f32.mrb[0].mxu0
  %v925 = vadd.f32 %v768, %v924
  %v926 = vpop.f32.mrb[0].mxu0
  %v927 = vpop.f32.mrb[0].mxu0
  %v928 = vadd.f32 %v768, %v927
  %v929 = vpop.f32.mrb[0].mxu0
  %930 = vmatprep.mubr.bf16.mxu0 0
  %931 = vmatmul.mubr.bf16.gmra.mrb[0].mxu0 %v725
  %v932 = vpop.f32.mrb[0].mxu0
  %v933 = vadd.f32 %v768, %v932
  %v934 = vpop.f32.mrb[0].mxu0
  %v935 = vpop.f32.mrb[0].mxu0
  %v936 = vadd.f32 %v768, %v935
  %v937 = vpop.f32.mrb[0].mxu0
  %938 = vmatprep.mubr.bf16.mxu0 0
  %939 = vmatmul.mubr.bf16.gmra.mrb[0].mxu0 %v726
  %v940 = vpop.f32.mrb[0].mxu0
  %v941 = vadd.f32 %v768, %v940
  %v942 = vpop.f32.mrb[0].mxu0
  %v943 = vpop.f32.mrb[0].mxu0
  %v944 = vadd.f32 %v768, %v943
  %v945 = vpop.f32.mrb[0].mxu0
  %946 = vmatprep.mubr.bf16.mxu0 0
  %947 = vmatmul.mubr.bf16.gmra.mrb[0].mxu0 %v727
  %v948 = vpop.f32.mrb[0].mxu0
  %v949 = vadd.f32 %v768, %v948
  %v950 = vpop.f32.mrb[0].mxu0
  %v951 = vpop.f32.mrb[0].mxu0
  %v952 = vadd.f32 %v768, %v951
  %v953 = vpop.f32.mrb[0].mxu0
  %954 = vmatprep.mubr.bf16.mxu0 0
  %955 = vmatmul.mubr.bf16.gmra.mrb[0].mxu0 %v728
  %v956 = vpop.f32.mrb[0].mxu0
  %v957 = vadd.f32 %v768, %v956
  %v958 = vpop.f32.mrb[0].mxu0
  %v959 = vpop.f32.mrb[0].mxu0
  %v960 = vadd.f32 %v768, %v959
  %v961 = vpop.f32.mrb[0].mxu0
  %962 = vmatprep.mubr.bf16.mxu0 0
  %963 = vmatmul.mubr.bf16.gmra.mrb[0].mxu0 %v729
  %v964 = vpop.f32.mrb[0].mxu0
  %v965 = vadd.f32 %v768, %v964
  %v966 = vpop.f32.mrb[0].mxu0
  %v967 = vpop.f32.mrb[0].mxu0
  %v968 = vadd.f32 %v768, %v967
  %v969 = vpop.f32.mrb[0].mxu0
  %970 = vmatprep.mubr.bf16.mxu0 0
  %971 = vmatmul.mubr.bf16.gmra.mrb[0].mxu0 %v730
  %v972 = vpop.f32.mrb[0].mxu0
  %v973 = vadd.f32 %v768, %v972
  %v974 = vpop.f32.mrb[0].mxu0
  %v975 = vpop.f32.mrb[0].mxu0
  %v976 = vadd.f32 %v768, %v975
  %v977 = vpop.f32.mrb[0].mxu0
  %978 = vmatprep.mubr.bf16.mxu0 0
  %979 = vmatmul.mubr.bf16.gmra.mrb[0].mxu0 %v731
  %v980 = vpop.f32.mrb[0].mxu0
  %v981 = vadd.f32 %v768, %v980
  %v982 = vpop.f32.mrb[0].mxu0
  %v983 = vpop.f32.mrb[0].mxu0
  %v984 = vadd.f32 %v768, %v983
  %v985 = vpop.f32.mrb[0].mxu0
  %986 = vmatprep.mubr.bf16.mxu0 0
  %987 = vmatmul.mubr.bf16.gmra.mrb[0].mxu0 %v732
  %v988 = vpop.f32.mrb[0].mxu0
  %v989 = vadd.f32 %v768, %v988
  %v990 = vpop.f32.mrb[0].mxu0
  %v991 = vpop.f32.mrb[0].mxu0
  %v992 = vadd.f32 %v768, %v991
  %v993 = vpop.f32.mrb[0].mxu0
  %994 = vmatprep.mubr.bf16.mxu0 0
  %995 = vmatmul.mubr.bf16.gmra.mrb[0].mxu0 %v733
  %v996 = vpop.f32.mrb[0].mxu0
  %v997 = vadd.f32 %v768, %v996
  %v998 = vpop.f32.mrb[0].mxu0
  %v999 = vpop.f32.mrb[0].mxu0
  %v1000 = vadd.f32 %v768, %v999
  %v1001 = vpop.f32.mrb[0].mxu0
  %1002 = vmatprep.mubr.bf16.mxu0 0
  %1003 = vmatmul.mubr.bf16.gmra.mrb[0].mxu0 %v734
  %v1004 = vpop.f32.mrb[0].mxu0
  %v1005 = vadd.f32 %v768, %v1004
  %v1006 = vpop.f32.mrb[0].mxu0
  %v1007 = vpop.f32.mrb[0].mxu0
  %v1008 = vadd.f32 %v768, %v1007
  %v1009 = vpop.f32.mrb[0].mxu0
  %1010 = vmatprep.mubr.bf16.mxu0 0
  %1011 = vmatmul.mubr.bf16.gmra.mrb[0].mxu0 %v735
  %v1012 = vpop.f32.mrb[0].mxu0
  %v1013 = vadd.f32 %v768, %v1012
  %v1014 = vpop.f32.mrb[0].mxu0
  %v1015 = vpop.f32.mrb[0].mxu0
  %v1016 = vadd.f32 %v768, %v1015
  %v1017 = vpop.f32.mrb[0].mxu0
  %1018 = vmatprep.mubr.bf16.mxu0 0
  %1019 = vmatmul.mubr.bf16.gmra.mrb[0].mxu0 %v736
  %v1020 = vpop.f32.mrb[0].mxu0
  %v1021 = vadd.f32 %v768, %v1020
  %v1022 = vpop.f32.mrb[0].mxu0
  %v1023 = vpop.f32.mrb[0].mxu0
  %v1024 = vadd.f32 %v768, %v1023
  %v1025 = vpop.f32.mrb[0].mxu0
  %1026 = vmatprep.mubr.bf16.mxu0 0
  %1027 = vmatmul.mubr.bf16.gmra.mrb[0].mxu0 %v737
  %v1028 = vpop.f32.mrb[0].mxu0
  %v1029 = vadd.f32 %v768, %v1028
  %v1030 = vpop.f32.mrb[0].mxu0
  %v1031 = vpop.f32.mrb[0].mxu0
  %v1032 = vadd.f32 %v768, %v1031
  %v1033 = vpop.f32.mrb[0].mxu0
  %1034 = vmatprep.mubr.bf16.mxu0 0
  %1035 = vmatmul.mubr.bf16.gmra.mrb[0].mxu0 %v738
  %v1036 = vpop.f32.mrb[0].mxu0
  %v1037 = vadd.f32 %v768, %v1036
  %v1038 = vpop.f32.mrb[0].mxu0
  %v1039 = vpop.f32.mrb[0].mxu0
  %v1040 = vadd.f32 %v768, %v1039
  %v1041 = vpop.f32.mrb[0].mxu0
  %1042 = vmatprep.mubr.bf16.mxu0 0
  %1043 = vmatmul.mubr.bf16.gmra.mrb[0].mxu0 %v739
  %v1044 = vpop.f32.mrb[0].mxu0
  %v1045 = vadd.f32 %v768, %v1044
  %v1046 = vpop.f32.mrb[0].mxu0
  %v1047 = vpop.f32.mrb[0].mxu0
  %v1048 = vadd.f32 %v768, %v1047
  %v1049 = vpop.f32.mrb[0].mxu0
  %1050 = vmatprep.mubr.bf16.mxu0 0
  %1051 = vmatmul.mubr.bf16.gmra.mrb[0].mxu0 %v740
  %v1052 = vpop.f32.mrb[0].mxu0
  %v1053 = vadd.f32 %v768, %v1052
  %v1054 = vpop.f32.mrb[0].mxu0
  %v1055 = vpop.f32.mrb[0].mxu0
  %v1056 = vadd.f32 %v768, %v1055
  %v1057 = vpop.f32.mrb[0].mxu0
  %1058 = vmatprep.mubr.bf16.mxu0 0
  %1059 = vmatmul.mubr.bf16.gmra.mrb[0].mxu0 %v741
  %v1060 = vpop.f32.mrb[0].mxu0
  %v1061 = vadd.f32 %v768, %v1060
  %v1062 = vpop.f32.mrb[0].mxu0
  %v1063 = vpop.f32.mrb[0].mxu0
  %v1064 = vadd.f32 %v768, %v1063
  %v1065 = vpop.f32.mrb[0].mxu0
  %1066 = vmatprep.mubr.bf16.mxu0 0
  %1067 = vmatmul.mubr.bf16.gmra.mrb[0].mxu0 %v742
  %v1068 = vpop.f32.mrb[0].mxu0
  %v1069 = vadd.f32 %v768, %v1068
  %v1070 = vpop.f32.mrb[0].mxu0
  %v1071 = vpop.f32.mrb[0].mxu0
  %v1072 = vadd.f32 %v768, %v1071
  %v1073 = vpop.f32.mrb[0].mxu0
  %1074 = vmatprep.mubr.bf16.mxu0 0
  %1075 = vmatmul.mubr.bf16.gmra.mrb[0].mxu0 %v743
  %v1076 = vpop.f32.mrb[0].mxu0
  %v1077 = vadd.f32 %v768, %v1076
  %v1078 = vpop.f32.mrb[0].mxu0
  %v1079 = vpop.f32.mrb[0].mxu0
  %v1080 = vadd.f32 %v768, %v1079
  %v1081 = vpop.f32.mrb[0].mxu0
  %1082 = vmatprep.mubr.bf16.mxu0 0
  %1083 = vmatmul.mubr.bf16.gmra.mrb[0].mxu0 %v744
  %v1084 = vpop.f32.mrb[0].mxu0
  %v1085 = vadd.f32 %v768, %v1084
  %v1086 = vpop.f32.mrb[0].mxu0
  %v1087 = vpop.f32.mrb[0].mxu0
  %v1088 = vadd.f32 %v768, %v1087
  %v1089 = vpop.f32.mrb[0].mxu0
  %1090 = vmatprep.mubr.bf16.mxu0 0
  %1091 = vmatmul.mubr.bf16.gmra.mrb[0].mxu0 %v745
  %v1092 = vpop.f32.mrb[0].mxu0
  %v1093 = vadd.f32 %v768, %v1092
  %v1094 = vpop.f32.mrb[0].mxu0
  %v1095 = vpop.f32.mrb[0].mxu0
  %v1096 = vadd.f32 %v768, %v1095
  %v1097 = vpop.f32.mrb[0].mxu0
  %1098 = vmatprep.mubr.bf16.mxu0 0
  %1099 = vmatmul.mubr.bf16.gmra.mrb[0].mxu0 %v746
  %v1100 = vpop.f32.mrb[0].mxu0
  %v1101 = vadd.f32 %v768, %v1100
  %v1102 = vpop.f32.mrb[0].mxu0
  %v1103 = vpop.f32.mrb[0].mxu0
  %v1104 = vadd.f32 %v768, %v1103
  %v1105 = vpop.f32.mrb[0].mxu0
  %1106 = vdwg.mxu0
  %v1107 = vmax.f32 %v853, 0.0
  %v1108 = vmax.f32 %v856, 0.0
  %v1109 = vmax.f32 %v861, 0.0
  %v1110 = vmax.f32 %v864, 0.0
  %v1111 = vmax.f32 %v869, 0.0
  %v1112 = vmax.f32 %v872, 0.0
  %v1113 = vmax.f32 %v877, 0.0
  %v1114 = vmax.f32 %v880, 0.0
  %v1115 = vmax.f32 %v885, 0.0
  %v1116 = vmax.f32 %v888, 0.0
  %v1117 = vmax.f32 %v893, 0.0
  %v1118 = vmax.f32 %v896, 0.0
  %v1119 = vmax.f32 %v901, 0.0
  %v1120 = vmax.f32 %v904, 0.0
  %v1121 = vmax.f32 %v909, 0.0
  %v1122 = vmax.f32 %v912, 0.0
  %v1123 = vmax.f32 %v917, 0.0
  %v1124 = vmax.f32 %v920, 0.0
  %v1125 = vmax.f32 %v925, 0.0
  %v1126 = vmax.f32 %v928, 0.0
  %v1127 = vmax.f32 %v933, 0.0
  %v1128 = vmax.f32 %v936, 0.0
  %v1129 = vmax.f32 %v941, 0.0
  %v1130 = vmax.f32 %v944, 0.0
  %v1131 = vmax.f32 %v949, 0.0
  %v1132 = vmax.f32 %v952, 0.0
  %v1133 = vmax.f32 %v957, 0.0
  %v1134 = vmax.f32 %v960, 0.0
  %v1135 = vmax.f32 %v965, 0.0
  %v1136 = vmax.f32 %v968, 0.0
  %v1137 = vmax.f32 %v973, 0.0
  %v1138 = vmax.f32 %v976, 0.0
  %v1139 = vmax.f32 %v981, 0.0
  %v1140 = vmax.f32 %v984, 0.0
  %v1141 = vmax.f32 %v989, 0.0
  %v1142 = vmax.f32 %v992, 0.0
  %v1143 = vmax.f32 %v997, 0.0
  %v1144 = vmax.f32 %v1000, 0.0
  %v1145 = vmax.f32 %v1005, 0.0
  %v1146 = vmax.f32 %v1008, 0.0
  %v1147 = vmax.f32 %v1013, 0.0
  %v1148 = vmax.f32 %v1016, 0.0
  %v1149 = vmax.f32 %v1021, 0.0
  %v1150 = vmax.f32 %v1024, 0.0
  %v1151 = vmax.f32 %v1029, 0.0
  %v1152 = vmax.f32 %v1032, 0.0
  %v1153 = vmax.f32 %v1037, 0.0
  %v1154 = vmax.f32 %v1040, 0.0
  %v1155 = vmax.f32 %v1045, 0.0
  %v1156 = vmax.f32 %v1048, 0.0
  %v1157 = vmax.f32 %v1053, 0.0
  %v1158 = vmax.f32 %v1056, 0.0
  %v1159 = vmax.f32 %v1061, 0.0
  %v1160 = vmax.f32 %v1064, 0.0
  %v1161 = vmax.f32 %v1069, 0.0
  %v1162 = vmax.f32 %v1072, 0.0
  %v1163 = vmax.f32 %v1077, 0.0
  %v1164 = vmax.f32 %v1080, 0.0
  %v1165 = vmax.f32 %v1085, 0.0
  %v1166 = vmax.f32 %v1088, 0.0
  %v1167 = vmax.f32 %v1093, 0.0
  %v1168 = vmax.f32 %v1096, 0.0
  %v1169 = vmax.f32 %v1101, 0.0
  %v1170 = vmax.f32 %v1104, 0.0
  %v1171 = vpack.c.bf16 %v1108, %v1107
  %v1172 = vpack.c.bf16 %v1110, %v1109
  %v1173 = vpack.c.bf16 %v1112, %v1111
  %v1174 = vpack.c.bf16 %v1114, %v1113
  %v1175 = vpack.c.bf16 %v1116, %v1115
  %v1176 = vpack.c.bf16 %v1118, %v1117
  %v1177 = vpack.c.bf16 %v1120, %v1119
  %v1178 = vpack.c.bf16 %v1122, %v1121
  %v1179 = vpack.c.bf16 %v1124, %v1123
  %v1180 = vpack.c.bf16 %v1126, %v1125
  %v1181 = vpack.c.bf16 %v1128, %v1127
  %v1182 = vpack.c.bf16 %v1130, %v1129
  %v1183 = vpack.c.bf16 %v1132, %v1131
  %v1184 = vpack.c.bf16 %v1134, %v1133
  %v1185 = vpack.c.bf16 %v1136, %v1135
  %v1186 = vpack.c.bf16 %v1138, %v1137
  %v1187 = vpack.c.bf16 %v1140, %v1139
  %v1188 = vpack.c.bf16 %v1142, %v1141
  %v1189 = vpack.c.bf16 %v1144, %v1143
  %v1190 = vpack.c.bf16 %v1146, %v1145
  %v1191 = vpack.c.bf16 %v1148, %v1147
  %v1192 = vpack.c.bf16 %v1150, %v1149
  %v1193 = vpack.c.bf16 %v1152, %v1151
  %v1194 = vpack.c.bf16 %v1154, %v1153
  %v1195 = vpack.c.bf16 %v1156, %v1155
  %v1196 = vpack.c.bf16 %v1158, %v1157
  %v1197 = vpack.c.bf16 %v1160, %v1159
  %v1198 = vpack.c.bf16 %v1162, %v1161
  %v1199 = vpack.c.bf16 %v1164, %v1163
  %v1200 = vpack.c.bf16 %v1166, %v1165
  %v1201 = vpack.c.bf16 %v1168, %v1167
  %v1202 = vpack.c.bf16 %v1170, %v1169
  %v1235 = vunpack.c.l.b16 %v1171
  %v1236 = vunpack.c.h.b16 %v1171
  %v1237 = vunpack.c.l.b16 %v1172
  %v1238 = vunpack.c.h.b16 %v1172
  %v1239 = vunpack.c.l.b16 %v1173
  %v1240 = vunpack.c.h.b16 %v1173
  %v1241 = vunpack.c.l.b16 %v1174
  %v1242 = vunpack.c.h.b16 %v1174
  %v1243 = vunpack.c.l.b16 %v1175
  %v1244 = vunpack.c.h.b16 %v1175
  %v1245 = vunpack.c.l.b16 %v1176
  %v1246 = vunpack.c.h.b16 %v1176
  %v1247 = vunpack.c.l.b16 %v1177
  %v1248 = vunpack.c.h.b16 %v1177
  %v1249 = vunpack.c.l.b16 %v1178
  %v1250 = vunpack.c.h.b16 %v1178
  %v1251 = vunpack.c.l.b16 %v1179
  %v1252 = vunpack.c.h.b16 %v1179
  %v1253 = vunpack.c.l.b16 %v1180
  %v1254 = vunpack.c.h.b16 %v1180
  %v1255 = vunpack.c.l.b16 %v1181
  %v1256 = vunpack.c.h.b16 %v1181
  %v1257 = vunpack.c.l.b16 %v1182
  %v1258 = vunpack.c.h.b16 %v1182
  %v1259 = vunpack.c.l.b16 %v1183
  %v1260 = vunpack.c.h.b16 %v1183
  %v1261 = vunpack.c.l.b16 %v1184
  %v1262 = vunpack.c.h.b16 %v1184
  %v1263 = vunpack.c.l.b16 %v1185
  %v1264 = vunpack.c.h.b16 %v1185
  %v1265 = vunpack.c.l.b16 %v1186
  %v1266 = vunpack.c.h.b16 %v1186
  %v1267 = vunpack.c.l.b16 %v1187
  %v1268 = vunpack.c.h.b16 %v1187
  %v1269 = vunpack.c.l.b16 %v1188
  %v1270 = vunpack.c.h.b16 %v1188
  %v1271 = vunpack.c.l.b16 %v1189
  %v1272 = vunpack.c.h.b16 %v1189
  %v1273 = vunpack.c.l.b16 %v1190
  %v1274 = vunpack.c.h.b16 %v1190
  %v1275 = vunpack.c.l.b16 %v1191
  %v1276 = vunpack.c.h.b16 %v1191
  %v1277 = vunpack.c.l.b16 %v1192
  %v1278 = vunpack.c.h.b16 %v1192
  %v1279 = vunpack.c.l.b16 %v1193
  %v1280 = vunpack.c.h.b16 %v1193
  %v1281 = vunpack.c.l.b16 %v1194
  %v1282 = vunpack.c.h.b16 %v1194
  %v1283 = vunpack.c.l.b16 %v1195
  %v1284 = vunpack.c.h.b16 %v1195
  %v1285 = vunpack.c.l.b16 %v1196
  %v1286 = vunpack.c.h.b16 %v1196
  %v1287 = vunpack.c.l.b16 %v1197
  %v1288 = vunpack.c.h.b16 %v1197
  %v1289 = vunpack.c.l.b16 %v1198
  %v1290 = vunpack.c.h.b16 %v1198
  %v1291 = vunpack.c.l.b16 %v1199
  %v1292 = vunpack.c.h.b16 %v1199
  %v1293 = vunpack.c.l.b16 %v1200
  %v1294 = vunpack.c.h.b16 %v1200
  %v1295 = vunpack.c.l.b16 %v1201
  %v1296 = vunpack.c.h.b16 %v1201
  %v1297 = vunpack.c.l.b16 %v1202
  %v1298 = vunpack.c.h.b16 %v1202
  %v1299 = vpack.c.b16 %v1235, %v1235
  %v1300 = vpack.c.b16 %v1236, %v1236
  %v1301 = vpack.c.b16 %v1237, %v1237
  %v1302 = vpack.c.b16 %v1238, %v1238
  %v1303 = vpack.c.b16 %v1239, %v1239
  %v1304 = vpack.c.b16 %v1240, %v1240
  %v1305 = vpack.c.b16 %v1241, %v1241
  %v1306 = vpack.c.b16 %v1242, %v1242
  %v1307 = vpack.c.b16 %v1243, %v1243
  %v1308 = vpack.c.b16 %v1244, %v1244
  %v1309 = vpack.c.b16 %v1245, %v1245
  %v1310 = vpack.c.b16 %v1246, %v1246
  %v1311 = vpack.c.b16 %v1247, %v1247
  %v1312 = vpack.c.b16 %v1248, %v1248
  %v1313 = vpack.c.b16 %v1249, %v1249
  %v1314 = vpack.c.b16 %v1250, %v1250
  %v1315 = vpack.c.b16 %v1251, %v1251
  %v1316 = vpack.c.b16 %v1252, %v1252
  %v1317 = vpack.c.b16 %v1253, %v1253
  %v1318 = vpack.c.b16 %v1254, %v1254
  %v1319 = vpack.c.b16 %v1255, %v1255
  %v1320 = vpack.c.b16 %v1256, %v1256
  %v1321 = vpack.c.b16 %v1257, %v1257
  %v1322 = vpack.c.b16 %v1258, %v1258
  %v1323 = vpack.c.b16 %v1259, %v1259
  %v1324 = vpack.c.b16 %v1260, %v1260
  %v1325 = vpack.c.b16 %v1261, %v1261
  %v1326 = vpack.c.b16 %v1262, %v1262
  %v1327 = vpack.c.b16 %v1263, %v1263
  %v1328 = vpack.c.b16 %v1264, %v1264
  %v1329 = vpack.c.b16 %v1265, %v1265
  %v1330 = vpack.c.b16 %v1266, %v1266
  %v1331 = vpack.c.b16 %v1267, %v1267
  %v1332 = vpack.c.b16 %v1268, %v1268
  %v1333 = vpack.c.b16 %v1269, %v1269
  %v1334 = vpack.c.b16 %v1270, %v1270
  %v1335 = vpack.c.b16 %v1271, %v1271
  %v1336 = vpack.c.b16 %v1272, %v1272
  %v1337 = vpack.c.b16 %v1273, %v1273
  %v1338 = vpack.c.b16 %v1274, %v1274
  %v1339 = vpack.c.b16 %v1275, %v1275
  %v1340 = vpack.c.b16 %v1276, %v1276
  %v1341 = vpack.c.b16 %v1277, %v1277
  %v1342 = vpack.c.b16 %v1278, %v1278
  %v1343 = vpack.c.b16 %v1279, %v1279
  %v1344 = vpack.c.b16 %v1280, %v1280
  %v1345 = vpack.c.b16 %v1281, %v1281
  %v1346 = vpack.c.b16 %v1282, %v1282
  %v1347 = vpack.c.b16 %v1283, %v1283
  %v1348 = vpack.c.b16 %v1284, %v1284
  %v1349 = vpack.c.b16 %v1285, %v1285
  %v1350 = vpack.c.b16 %v1286, %v1286
  %v1351 = vpack.c.b16 %v1287, %v1287
  %v1352 = vpack.c.b16 %v1288, %v1288
  %v1353 = vpack.c.b16 %v1289, %v1289
  %v1354 = vpack.c.b16 %v1290, %v1290
  %v1355 = vpack.c.b16 %v1291, %v1291
  %v1356 = vpack.c.b16 %v1292, %v1292
  %v1357 = vpack.c.b16 %v1293, %v1293
  %v1358 = vpack.c.b16 %v1294, %v1294
  %v1359 = vpack.c.b16 %v1295, %v1295
  %v1360 = vpack.c.b16 %v1296, %v1296
  %v1361 = vpack.c.b16 %v1297, %v1297
  %v1362 = vpack.c.b16 %v1298, %v1298
  %vm1427 = vcmask 519168
  %1428 = vst.msk [vmem:[%s10] sm:$0xf] %vm1427, %v1299
  %1429 = vst.msk [vmem:[%s10 + $0x4] sm:$0xf] %vm1427, %v1300
  %1430 = vst.msk [vmem:[%s10 + $0x8] sm:$0xf] %vm1427, %v1301
  %1431 = vst.msk [vmem:[%s10 + $0xc] sm:$0xf] %vm1427, %v1302
  %1432 = vst.msk [vmem:[%s10 + $0x10] sm:$0xf] %vm1427, %v1303
  %1433 = vst.msk [vmem:[%s10 + $0x14] sm:$0xf] %vm1427, %v1304
  %1434 = vst.msk [vmem:[%s10 + $0x18] sm:$0xf] %vm1427, %v1305
  %1435 = vst.msk [vmem:[%s10 + $0x1c] sm:$0xf] %vm1427, %v1306
  %1436 = vst.msk [vmem:[%s10 + $0x20] sm:$0xf] %vm1427, %v1307
  %1437 = vst.msk [vmem:[%s10 + $0x24] sm:$0xf] %vm1427, %v1308
  %1438 = vst.msk [vmem:[%s10 + $0x28] sm:$0xf] %vm1427, %v1309
  %1439 = vst.msk [vmem:[%s10 + $0x2c] sm:$0xf] %vm1427, %v1310
  %1440 = vst.msk [vmem:[%s10 + $0x30] sm:$0xf] %vm1427, %v1311
  %1441 = vst.msk [vmem:[%s10 + $0x34] sm:$0xf] %vm1427, %v1312
  %1442 = vst.msk [vmem:[%s10 + $0x38] sm:$0xf] %vm1427, %v1313
  %1443 = vst.msk [vmem:[%s10 + $0x3c] sm:$0xf] %vm1427, %v1314
  %1444 = vst.msk [vmem:[%s10 + $0x40] sm:$0xf] %vm1427, %v1315
  %1445 = vst.msk [vmem:[%s10 + $0x44] sm:$0xf] %vm1427, %v1316
  %1446 = vst.msk [vmem:[%s10 + $0x48] sm:$0xf] %vm1427, %v1317
  %1447 = vst.msk [vmem:[%s10 + $0x4c] sm:$0xf] %vm1427, %v1318
  %1448 = vst.msk [vmem:[%s10 + $0x50] sm:$0xf] %vm1427, %v1319
  %1449 = vst.msk [vmem:[%s10 + $0x54] sm:$0xf] %vm1427, %v1320
  %1450 = vst.msk [vmem:[%s10 + $0x58] sm:$0xf] %vm1427, %v1321
  %1451 = vst.msk [vmem:[%s10 + $0x5c] sm:$0xf] %vm1427, %v1322
  %1452 = vst.msk [vmem:[%s10 + $0x60] sm:$0xf] %vm1427, %v1323
  %1453 = vst.msk [vmem:[%s10 + $0x64] sm:$0xf] %vm1427, %v1324
  %1454 = vst.msk [vmem:[%s10 + $0x68] sm:$0xf] %vm1427, %v1325
  %1455 = vst.msk [vmem:[%s10 + $0x6c] sm:$0xf] %vm1427, %v1326
  %1456 = vst.msk [vmem:[%s10 + $0x70] sm:$0xf] %vm1427, %v1327
  %1457 = vst.msk [vmem:[%s10 + $0x74] sm:$0xf] %vm1427, %v1328
  %1458 = vst.msk [vmem:[%s10 + $0x78] sm:$0xf] %vm1427, %v1329
  %1459 = vst.msk [vmem:[%s10 + $0x7c] sm:$0xf] %vm1427, %v1330
  %1460 = vst.msk [vmem:[%s10 + $0x80] sm:$0xf] %vm1427, %v1331
  %1461 = vst.msk [vmem:[%s10 + $0x84] sm:$0xf] %vm1427, %v1332
  %1462 = vst.msk [vmem:[%s10 + $0x88] sm:$0xf] %vm1427, %v1333
  %1463 = vst.msk [vmem:[%s10 + $0x8c] sm:$0xf] %vm1427, %v1334
  %1464 = vst.msk [vmem:[%s10 + $0x90] sm:$0xf] %vm1427, %v1335
  %1465 = vst.msk [vmem:[%s10 + $0x94] sm:$0xf] %vm1427, %v1336
  %1466 = vst.msk [vmem:[%s10 + $0x98] sm:$0xf] %vm1427, %v1337
  %1467 = vst.msk [vmem:[%s10 + $0x9c] sm:$0xf] %vm1427, %v1338
  %1468 = vst.msk [vmem:[%s10 + $0xa0] sm:$0xf] %vm1427, %v1339
  %1469 = vst.msk [vmem:[%s10 + $0xa4] sm:$0xf] %vm1427, %v1340
  %1470 = vst.msk [vmem:[%s10 + $0xa8] sm:$0xf] %vm1427, %v1341
  %1471 = vst.msk [vmem:[%s10 + $0xac] sm:$0xf] %vm1427, %v1342
  %1472 = vst.msk [vmem:[%s10 + $0xb0] sm:$0xf] %vm1427, %v1343
  %1473 = vst.msk [vmem:[%s10 + $0xb4] sm:$0xf] %vm1427, %v1344
  %1474 = vst.msk [vmem:[%s10 + $0xb8] sm:$0xf] %vm1427, %v1345
  %1475 = vst.msk [vmem:[%s10 + $0xbc] sm:$0xf] %vm1427, %v1346
  %1476 = vst.msk [vmem:[%s10 + $0xc0] sm:$0xf] %vm1427, %v1347
  %1477 = vst.msk [vmem:[%s10 + $0xc4] sm:$0xf] %vm1427, %v1348
  %1478 = vst.msk [vmem:[%s10 + $0xc8] sm:$0xf] %vm1427, %v1349
  %1479 = vst.msk [vmem:[%s10 + $0xcc] sm:$0xf] %vm1427, %v1350
  %1480 = vst.msk [vmem:[%s10 + $0xd0] sm:$0xf] %vm1427, %v1351
  %1481 = vst.msk [vmem:[%s10 + $0xd4] sm:$0xf] %vm1427, %v1352
  %1482 = vst.msk [vmem:[%s10 + $0xd8] sm:$0xf] %vm1427, %v1353
  %1483 = vst.msk [vmem:[%s10 + $0xdc] sm:$0xf] %vm1427, %v1354
  %1484 = vst.msk [vmem:[%s10 + $0xe0] sm:$0xf] %vm1427, %v1355
  %1485 = vst.msk [vmem:[%s10 + $0xe4] sm:$0xf] %vm1427, %v1356
  %1486 = vst.msk [vmem:[%s10 + $0xe8] sm:$0xf] %vm1427, %v1357
  %1487 = vst.msk [vmem:[%s10 + $0xec] sm:$0xf] %vm1427, %v1358
  %1488 = vst.msk [vmem:[%s10 + $0xf0] sm:$0xf] %vm1427, %v1359
  %1489 = vst.msk [vmem:[%s10 + $0xf4] sm:$0xf] %vm1427, %v1360
  %1490 = vst.msk [vmem:[%s10 + $0xf8] sm:$0xf] %vm1427, %v1361
  %1491 = vst.msk [vmem:[%s10 + $0xfc] sm:$0xf] %vm1427, %v1362
  %v1492 = vld [vmem:[%s5] sm:$0xf]
  %v1493 = vld [vmem:[%s5 + $0x4] sm:$0xf]
  %v1494 = vld [vmem:[%s5 + $0x8] sm:$0xf]
  %v1495 = vld [vmem:[%s5 + $0xc] sm:$0xf]
  %v1496 = vld [vmem:[%s5 + $0x10] sm:$0xf]
  %v1497 = vld [vmem:[%s5 + $0x14] sm:$0xf]
  %v1498 = vld [vmem:[%s5 + $0x18] sm:$0xf]
  %v1499 = vld [vmem:[%s5 + $0x1c] sm:$0xf]
  %v1500 = vld [vmem:[%s5 + $0x20] sm:$0xf]
  %v1501 = vld [vmem:[%s5 + $0x24] sm:$0xf]
  %v1502 = vld [vmem:[%s5 + $0x28] sm:$0xf]
  %v1503 = vld [vmem:[%s5 + $0x2c] sm:$0xf]
  %v1504 = vld [vmem:[%s5 + $0x30] sm:$0xf]
  %v1505 = vld [vmem:[%s5 + $0x34] sm:$0xf]
  %v1506 = vld [vmem:[%s5 + $0x38] sm:$0xf]
  %v1507 = vld [vmem:[%s5 + $0x3c] sm:$0xf]
  %v1508 = vld [vmem:[%s6] sm:$0x1]
  %v1510 = vlaneseq
  %v1511 = vshrl.u32 %v1510, 7
  %v1512 = vsub.s32 0, %v1511
  %v1513 = vrot.slane %v1508, %v1512
  %v1531 = vunpack.c.l.b16 %v1492
  %v1532 = vunpack.c.l.b16 %v1493
  %v1533 = vunpack.c.l.b16 %v1494
  %v1534 = vunpack.c.l.b16 %v1495
  %v1535 = vunpack.c.l.b16 %v1496
  %v1536 = vunpack.c.l.b16 %v1497
  %v1537 = vunpack.c.l.b16 %v1498
  %v1538 = vunpack.c.l.b16 %v1499
  %v1539 = vunpack.c.l.b16 %v1500
  %v1540 = vunpack.c.l.b16 %v1501
  %v1541 = vunpack.c.l.b16 %v1502
  %v1542 = vunpack.c.l.b16 %v1503
  %v1543 = vunpack.c.l.b16 %v1504
  %v1544 = vunpack.c.l.b16 %v1505
  %v1545 = vunpack.c.l.b16 %v1506
  %v1546 = vunpack.c.l.b16 %v1507
  %v1547 = vpack.c.b16 %v1532, %v1531
  %v1548 = vpack.c.b16 %v1534, %v1533
  %v1549 = vpack.c.b16 %v1536, %v1535
  %v1550 = vpack.c.b16 %v1538, %v1537
  %v1551 = vpack.c.b16 %v1540, %v1539
  %v1552 = vpack.c.b16 %v1542, %v1541
  %v1553 = vpack.c.b16 %v1544, %v1543
  %v1554 = vpack.c.b16 %v1546, %v1545
  %1563 = vmatprep.subr.bf16.mxu0 0
  %1564 = vmatpush1.bf16.msra.mxu0 %v1547
  %1565 = vmatprep.subr.bf16.mxu0 0
  %1566 = vmatpush1.bf16.msra.mxu0 %v1548
  %1567 = vmatprep.subr.bf16.mxu0 0
  %1568 = vmatpush1.bf16.msra.mxu0 %v1549
  %1569 = vmatprep.subr.bf16.mxu0 0
  %1570 = vmatpush1.bf16.msra.mxu0 %v1550
  %1571 = vmatprep.subr.bf16.mxu0 0
  %1572 = vmatpush1.bf16.msra.mxu0 %v1551
  %1573 = vmatprep.subr.bf16.mxu0 0
  %1574 = vmatpush1.bf16.msra.mxu0 %v1552
  %1575 = vmatprep.subr.bf16.mxu0 0
  %1576 = vmatpush1.bf16.msra.mxu0 %v1553
  %1577 = vmatprep.subr.bf16.mxu0 0
  %1578 = vmatpush1.bf16.msra.mxu0 %v1554
  %1579 = vmatprep.subr.bf16.mxu0 0
  %1580 = vmatpush1.bf16.msra.mxu0 0
  %1581 = vmatprep.subr.bf16.mxu0 0
  %1582 = vmatpush1.bf16.msra.mxu0 0
  %1583 = vmatprep.subr.bf16.mxu0 0
  %1584 = vmatpush1.bf16.msra.mxu0 0
  %1585 = vmatprep.subr.bf16.mxu0 0
  %1586 = vmatpush1.bf16.msra.mxu0 0
  %1587 = vmatprep.subr.bf16.mxu0 0
  %1588 = vmatpush1.bf16.msra.mxu0 0
  %1589 = vmatprep.subr.bf16.mxu0 0
  %1590 = vmatpush1.bf16.msra.mxu0 0
  %1591 = vmatprep.subr.bf16.mxu0 0
  %1592 = vmatpush1.bf16.msra.mxu0 0
  %1593 = vmatprep.subr.bf16.mxu0 0
  %1594 = vmatpush1.bf16.msra.mxu0 0
  %1595 = vmatprep.mubr.bf16.mxu0 0
  %1596 = vmatmul.mubr.bf16.gmra.mrb[0].mxu0 %v1171
  %v1597 = vpop.f32.mrb[0].mxu0
  %v1598 = vadd.f32 %v1513, %v1597
  %v1599 = vpop.f32.mrb[0].mxu0
  %v1600 = vpop.f32.mrb[0].mxu0
  %v1601 = vadd.f32 %v1513, %v1600
  %v1602 = vpop.f32.mrb[0].mxu0
  %1603 = vmatprep.mubr.bf16.mxu0 0
  %1604 = vmatmul.mubr.bf16.gmra.mrb[0].mxu0 %v1172
  %v1605 = vpop.f32.mrb[0].mxu0
  %v1606 = vadd.f32 %v1513, %v1605
  %v1607 = vpop.f32.mrb[0].mxu0
  %v1608 = vpop.f32.mrb[0].mxu0
  %v1609 = vadd.f32 %v1513, %v1608
  %v1610 = vpop.f32.mrb[0].mxu0
  %1611 = vmatprep.mubr.bf16.mxu0 0
  %1612 = vmatmul.mubr.bf16.gmra.mrb[0].mxu0 %v1173
  %v1613 = vpop.f32.mrb[0].mxu0
  %v1614 = vadd.f32 %v1513, %v1613
  %v1615 = vpop.f32.mrb[0].mxu0
  %v1616 = vpop.f32.mrb[0].mxu0
  %v1617 = vadd.f32 %v1513, %v1616
  %v1618 = vpop.f32.mrb[0].mxu0
  %1619 = vmatprep.mubr.bf16.mxu0 0
  %1620 = vmatmul.mubr.bf16.gmra.mrb[0].mxu0 %v1174
  %v1621 = vpop.f32.mrb[0].mxu0
  %v1622 = vadd.f32 %v1513, %v1621
  %v1623 = vpop.f32.mrb[0].mxu0
  %v1624 = vpop.f32.mrb[0].mxu0
  %v1625 = vadd.f32 %v1513, %v1624
  %v1626 = vpop.f32.mrb[0].mxu0
  %1627 = vmatprep.mubr.bf16.mxu0 0
  %1628 = vmatmul.mubr.bf16.gmra.mrb[0].mxu0 %v1175
  %v1629 = vpop.f32.mrb[0].mxu0
  %v1630 = vadd.f32 %v1513, %v1629
  %v1631 = vpop.f32.mrb[0].mxu0
  %v1632 = vpop.f32.mrb[0].mxu0
  %v1633 = vadd.f32 %v1513, %v1632
  %v1634 = vpop.f32.mrb[0].mxu0
  %1635 = vmatprep.mubr.bf16.mxu0 0
  %1636 = vmatmul.mubr.bf16.gmra.mrb[0].mxu0 %v1176
  %v1637 = vpop.f32.mrb[0].mxu0
  %v1638 = vadd.f32 %v1513, %v1637
  %v1639 = vpop.f32.mrb[0].mxu0
  %v1640 = vpop.f32.mrb[0].mxu0
  %v1641 = vadd.f32 %v1513, %v1640
  %v1642 = vpop.f32.mrb[0].mxu0
  %1643 = vmatprep.mubr.bf16.mxu0 0
  %1644 = vmatmul.mubr.bf16.gmra.mrb[0].mxu0 %v1177
  %v1645 = vpop.f32.mrb[0].mxu0
  %v1646 = vadd.f32 %v1513, %v1645
  %v1647 = vpop.f32.mrb[0].mxu0
  %v1648 = vpop.f32.mrb[0].mxu0
  %v1649 = vadd.f32 %v1513, %v1648
  %v1650 = vpop.f32.mrb[0].mxu0
  %1651 = vmatprep.mubr.bf16.mxu0 0
  %1652 = vmatmul.mubr.bf16.gmra.mrb[0].mxu0 %v1178
  %v1653 = vpop.f32.mrb[0].mxu0
  %v1654 = vadd.f32 %v1513, %v1653
  %v1655 = vpop.f32.mrb[0].mxu0
  %v1656 = vpop.f32.mrb[0].mxu0
  %v1657 = vadd.f32 %v1513, %v1656
  %v1658 = vpop.f32.mrb[0].mxu0
  %1659 = vmatprep.mubr.bf16.mxu0 0
  %1660 = vmatmul.mubr.bf16.gmra.mrb[0].mxu0 %v1179
  %v1661 = vpop.f32.mrb[0].mxu0
  %v1662 = vadd.f32 %v1513, %v1661
  %v1663 = vpop.f32.mrb[0].mxu0
  %v1664 = vpop.f32.mrb[0].mxu0
  %v1665 = vadd.f32 %v1513, %v1664
  %v1666 = vpop.f32.mrb[0].mxu0
  %1667 = vmatprep.mubr.bf16.mxu0 0
  %1668 = vmatmul.mubr.bf16.gmra.mrb[0].mxu0 %v1180
  %v1669 = vpop.f32.mrb[0].mxu0
  %v1670 = vadd.f32 %v1513, %v1669
  %v1671 = vpop.f32.mrb[0].mxu0
  %v1672 = vpop.f32.mrb[0].mxu0
  %v1673 = vadd.f32 %v1513, %v1672
  %v1674 = vpop.f32.mrb[0].mxu0
  %1675 = vmatprep.mubr.bf16.mxu0 0
  %1676 = vmatmul.mubr.bf16.gmra.mrb[0].mxu0 %v1181
  %v1677 = vpop.f32.mrb[0].mxu0
  %v1678 = vadd.f32 %v1513, %v1677
  %v1679 = vpop.f32.mrb[0].mxu0
  %v1680 = vpop.f32.mrb[0].mxu0
  %v1681 = vadd.f32 %v1513, %v1680
  %v1682 = vpop.f32.mrb[0].mxu0
  %1683 = vmatprep.mubr.bf16.mxu0 0
  %1684 = vmatmul.mubr.bf16.gmra.mrb[0].mxu0 %v1182
  %v1685 = vpop.f32.mrb[0].mxu0
  %v1686 = vadd.f32 %v1513, %v1685
  %v1687 = vpop.f32.mrb[0].mxu0
  %v1688 = vpop.f32.mrb[0].mxu0
  %v1689 = vadd.f32 %v1513, %v1688
  %v1690 = vpop.f32.mrb[0].mxu0
  %1691 = vmatprep.mubr.bf16.mxu0 0
  %1692 = vmatmul.mubr.bf16.gmra.mrb[0].mxu0 %v1183
  %v1693 = vpop.f32.mrb[0].mxu0
  %v1694 = vadd.f32 %v1513, %v1693
  %v1695 = vpop.f32.mrb[0].mxu0
  %v1696 = vpop.f32.mrb[0].mxu0
  %v1697 = vadd.f32 %v1513, %v1696
  %v1698 = vpop.f32.mrb[0].mxu0
  %1699 = vmatprep.mubr.bf16.mxu0 0
  %1700 = vmatmul.mubr.bf16.gmra.mrb[0].mxu0 %v1184
  %v1701 = vpop.f32.mrb[0].mxu0
  %v1702 = vadd.f32 %v1513, %v1701
  %v1703 = vpop.f32.mrb[0].mxu0
  %v1704 = vpop.f32.mrb[0].mxu0
  %v1705 = vadd.f32 %v1513, %v1704
  %v1706 = vpop.f32.mrb[0].mxu0
  %1707 = vmatprep.mubr.bf16.mxu0 0
  %1708 = vmatmul.mubr.bf16.gmra.mrb[0].mxu0 %v1185
  %v1709 = vpop.f32.mrb[0].mxu0
  %v1710 = vadd.f32 %v1513, %v1709
  %v1711 = vpop.f32.mrb[0].mxu0
  %v1712 = vpop.f32.mrb[0].mxu0
  %v1713 = vadd.f32 %v1513, %v1712
  %v1714 = vpop.f32.mrb[0].mxu0
  %1715 = vmatprep.mubr.bf16.mxu0 0
  %1716 = vmatmul.mubr.bf16.gmra.mrb[0].mxu0 %v1186
  %v1717 = vpop.f32.mrb[0].mxu0
  %v1718 = vadd.f32 %v1513, %v1717
  %v1719 = vpop.f32.mrb[0].mxu0
  %v1720 = vpop.f32.mrb[0].mxu0
  %v1721 = vadd.f32 %v1513, %v1720
  %v1722 = vpop.f32.mrb[0].mxu0
  %1723 = vmatprep.mubr.bf16.mxu0 0
  %1724 = vmatmul.mubr.bf16.gmra.mrb[0].mxu0 %v1187
  %v1725 = vpop.f32.mrb[0].mxu0
  %v1726 = vadd.f32 %v1513, %v1725
  %v1727 = vpop.f32.mrb[0].mxu0
  %v1728 = vpop.f32.mrb[0].mxu0
  %v1729 = vadd.f32 %v1513, %v1728
  %v1730 = vpop.f32.mrb[0].mxu0
  %1731 = vmatprep.mubr.bf16.mxu0 0
  %1732 = vmatmul.mubr.bf16.gmra.mrb[0].mxu0 %v1188
  %v1733 = vpop.f32.mrb[0].mxu0
  %v1734 = vadd.f32 %v1513, %v1733
  %v1735 = vpop.f32.mrb[0].mxu0
  %v1736 = vpop.f32.mrb[0].mxu0
  %v1737 = vadd.f32 %v1513, %v1736
  %v1738 = vpop.f32.mrb[0].mxu0
  %1739 = vmatprep.mubr.bf16.mxu0 0
  %1740 = vmatmul.mubr.bf16.gmra.mrb[0].mxu0 %v1189
  %v1741 = vpop.f32.mrb[0].mxu0
  %v1742 = vadd.f32 %v1513, %v1741
  %v1743 = vpop.f32.mrb[0].mxu0
  %v1744 = vpop.f32.mrb[0].mxu0
  %v1745 = vadd.f32 %v1513, %v1744
  %v1746 = vpop.f32.mrb[0].mxu0
  %1747 = vmatprep.mubr.bf16.mxu0 0
  %1748 = vmatmul.mubr.bf16.gmra.mrb[0].mxu0 %v1190
  %v1749 = vpop.f32.mrb[0].mxu0
  %v1750 = vadd.f32 %v1513, %v1749
  %v1751 = vpop.f32.mrb[0].mxu0
  %v1752 = vpop.f32.mrb[0].mxu0
  %v1753 = vadd.f32 %v1513, %v1752
  %v1754 = vpop.f32.mrb[0].mxu0
  %1755 = vmatprep.mubr.bf16.mxu0 0
  %1756 = vmatmul.mubr.bf16.gmra.mrb[0].mxu0 %v1191
  %v1757 = vpop.f32.mrb[0].mxu0
  %v1758 = vadd.f32 %v1513, %v1757
  %v1759 = vpop.f32.mrb[0].mxu0
  %v1760 = vpop.f32.mrb[0].mxu0
  %v1761 = vadd.f32 %v1513, %v1760
  %v1762 = vpop.f32.mrb[0].mxu0
  %1763 = vmatprep.mubr.bf16.mxu0 0
  %1764 = vmatmul.mubr.bf16.gmra.mrb[0].mxu0 %v1192
  %v1765 = vpop.f32.mrb[0].mxu0
  %v1766 = vadd.f32 %v1513, %v1765
  %v1767 = vpop.f32.mrb[0].mxu0
  %v1768 = vpop.f32.mrb[0].mxu0
  %v1769 = vadd.f32 %v1513, %v1768
  %v1770 = vpop.f32.mrb[0].mxu0
  %1771 = vmatprep.mubr.bf16.mxu0 0
  %1772 = vmatmul.mubr.bf16.gmra.mrb[0].mxu0 %v1193
  %v1773 = vpop.f32.mrb[0].mxu0
  %v1774 = vadd.f32 %v1513, %v1773
  %v1775 = vpop.f32.mrb[0].mxu0
  %v1776 = vpop.f32.mrb[0].mxu0
  %v1777 = vadd.f32 %v1513, %v1776
  %v1778 = vpop.f32.mrb[0].mxu0
  %1779 = vmatprep.mubr.bf16.mxu0 0
  %1780 = vmatmul.mubr.bf16.gmra.mrb[0].mxu0 %v1194
  %v1781 = vpop.f32.mrb[0].mxu0
  %v1782 = vadd.f32 %v1513, %v1781
  %v1783 = vpop.f32.mrb[0].mxu0
  %v1784 = vpop.f32.mrb[0].mxu0
  %v1785 = vadd.f32 %v1513, %v1784
  %v1786 = vpop.f32.mrb[0].mxu0
  %1787 = vmatprep.mubr.bf16.mxu0 0
  %1788 = vmatmul.mubr.bf16.gmra.mrb[0].mxu0 %v1195
  %v1789 = vpop.f32.mrb[0].mxu0
  %v1790 = vadd.f32 %v1513, %v1789
  %v1791 = vpop.f32.mrb[0].mxu0
  %v1792 = vpop.f32.mrb[0].mxu0
  %v1793 = vadd.f32 %v1513, %v1792
  %v1794 = vpop.f32.mrb[0].mxu0
  %1795 = vmatprep.mubr.bf16.mxu0 0
  %1796 = vmatmul.mubr.bf16.gmra.mrb[0].mxu0 %v1196
  %v1797 = vpop.f32.mrb[0].mxu0
  %v1798 = vadd.f32 %v1513, %v1797
  %v1799 = vpop.f32.mrb[0].mxu0
  %v1800 = vpop.f32.mrb[0].mxu0
  %v1801 = vadd.f32 %v1513, %v1800
  %v1802 = vpop.f32.mrb[0].mxu0
  %1803 = vmatprep.mubr.bf16.mxu0 0
  %1804 = vmatmul.mubr.bf16.gmra.mrb[0].mxu0 %v1197
  %v1805 = vpop.f32.mrb[0].mxu0
  %v1806 = vadd.f32 %v1513, %v1805
  %v1807 = vpop.f32.mrb[0].mxu0
  %v1808 = vpop.f32.mrb[0].mxu0
  %v1809 = vadd.f32 %v1513, %v1808
  %v1810 = vpop.f32.mrb[0].mxu0
  %1811 = vmatprep.mubr.bf16.mxu0 0
  %1812 = vmatmul.mubr.bf16.gmra.mrb[0].mxu0 %v1198
  %v1813 = vpop.f32.mrb[0].mxu0
  %v1814 = vadd.f32 %v1513, %v1813
  %v1815 = vpop.f32.mrb[0].mxu0
  %v1816 = vpop.f32.mrb[0].mxu0
  %v1817 = vadd.f32 %v1513, %v1816
  %v1818 = vpop.f32.mrb[0].mxu0
  %1819 = vmatprep.mubr.bf16.mxu0 0
  %1820 = vmatmul.mubr.bf16.gmra.mrb[0].mxu0 %v1199
  %v1821 = vpop.f32.mrb[0].mxu0
  %v1822 = vadd.f32 %v1513, %v1821
  %v1823 = vpop.f32.mrb[0].mxu0
  %v1824 = vpop.f32.mrb[0].mxu0
  %v1825 = vadd.f32 %v1513, %v1824
  %v1826 = vpop.f32.mrb[0].mxu0
  %1827 = vmatprep.mubr.bf16.mxu0 0
  %1828 = vmatmul.mubr.bf16.gmra.mrb[0].mxu0 %v1200
  %v1829 = vpop.f32.mrb[0].mxu0
  %v1830 = vadd.f32 %v1513, %v1829
  %v1831 = vpop.f32.mrb[0].mxu0
  %v1832 = vpop.f32.mrb[0].mxu0
  %v1833 = vadd.f32 %v1513, %v1832
  %v1834 = vpop.f32.mrb[0].mxu0
  %1835 = vmatprep.mubr.bf16.mxu0 0
  %1836 = vmatmul.mubr.bf16.gmra.mrb[0].mxu0 %v1201
  %v1837 = vpop.f32.mrb[0].mxu0
  %v1838 = vadd.f32 %v1513, %v1837
  %v1839 = vpop.f32.mrb[0].mxu0
  %v1840 = vpop.f32.mrb[0].mxu0
  %v1841 = vadd.f32 %v1513, %v1840
  %v1842 = vpop.f32.mrb[0].mxu0
  %1843 = vmatprep.mubr.bf16.mxu0 0
  %1844 = vmatmul.mubr.bf16.gmra.mrb[0].mxu0 %v1202
  %v1845 = vpop.f32.mrb[0].mxu0
  %v1846 = vadd.f32 %v1513, %v1845
  %v1847 = vpop.f32.mrb[0].mxu0
  %v1848 = vpop.f32.mrb[0].mxu0
  %v1849 = vadd.f32 %v1513, %v1848
  %v1850 = vpop.f32.mrb[0].mxu0
  %1851 = vdwg.mxu0
  %v1852 = vmax.f32 %v1598, 0.0
  %v1853 = vmax.f32 %v1601, 0.0
  %v1854 = vmax.f32 %v1606, 0.0
  %v1855 = vmax.f32 %v1609, 0.0
  %v1856 = vmax.f32 %v1614, 0.0
  %v1857 = vmax.f32 %v1617, 0.0
  %v1858 = vmax.f32 %v1622, 0.0
  %v1859 = vmax.f32 %v1625, 0.0
  %v1860 = vmax.f32 %v1630, 0.0
  %v1861 = vmax.f32 %v1633, 0.0
  %v1862 = vmax.f32 %v1638, 0.0
  %v1863 = vmax.f32 %v1641, 0.0
  %v1864 = vmax.f32 %v1646, 0.0
  %v1865 = vmax.f32 %v1649, 0.0
  %v1866 = vmax.f32 %v1654, 0.0
  %v1867 = vmax.f32 %v1657, 0.0
  %v1868 = vmax.f32 %v1662, 0.0
  %v1869 = vmax.f32 %v1665, 0.0
  %v1870 = vmax.f32 %v1670, 0.0
  %v1871 = vmax.f32 %v1673, 0.0
  %v1872 = vmax.f32 %v1678, 0.0
  %v1873 = vmax.f32 %v1681, 0.0
  %v1874 = vmax.f32 %v1686, 0.0
  %v1875 = vmax.f32 %v1689, 0.0
  %v1876 = vmax.f32 %v1694, 0.0
  %v1877 = vmax.f32 %v1697, 0.0
  %v1878 = vmax.f32 %v1702, 0.0
  %v1879 = vmax.f32 %v1705, 0.0
  %v1880 = vmax.f32 %v1710, 0.0
  %v1881 = vmax.f32 %v1713, 0.0
  %v1882 = vmax.f32 %v1718, 0.0
  %v1883 = vmax.f32 %v1721, 0.0
  %v1884 = vmax.f32 %v1726, 0.0
  %v1885 = vmax.f32 %v1729, 0.0
  %v1886 = vmax.f32 %v1734, 0.0
  %v1887 = vmax.f32 %v1737, 0.0
  %v1888 = vmax.f32 %v1742, 0.0
  %v1889 = vmax.f32 %v1745, 0.0
  %v1890 = vmax.f32 %v1750, 0.0
  %v1891 = vmax.f32 %v1753, 0.0
  %v1892 = vmax.f32 %v1758, 0.0
  %v1893 = vmax.f32 %v1761, 0.0
  %v1894 = vmax.f32 %v1766, 0.0
  %v1895 = vmax.f32 %v1769, 0.0
  %v1896 = vmax.f32 %v1774, 0.0
  %v1897 = vmax.f32 %v1777, 0.0
  %v1898 = vmax.f32 %v1782, 0.0
  %v1899 = vmax.f32 %v1785, 0.0
  %v1900 = vmax.f32 %v1790, 0.0
  %v1901 = vmax.f32 %v1793, 0.0
  %v1902 = vmax.f32 %v1798, 0.0
  %v1903 = vmax.f32 %v1801, 0.0
  %v1904 = vmax.f32 %v1806, 0.0
  %v1905 = vmax.f32 %v1809, 0.0
  %v1906 = vmax.f32 %v1814, 0.0
  %v1907 = vmax.f32 %v1817, 0.0
  %v1908 = vmax.f32 %v1822, 0.0
  %v1909 = vmax.f32 %v1825, 0.0
  %v1910 = vmax.f32 %v1830, 0.0
  %v1911 = vmax.f32 %v1833, 0.0
  %v1912 = vmax.f32 %v1838, 0.0
  %v1913 = vmax.f32 %v1841, 0.0
  %v1914 = vmax.f32 %v1846, 0.0
  %v1915 = vmax.f32 %v1849, 0.0
  %v1916 = vpack.c.bf16 %v1853, %v1852
  %v1917 = vpack.c.bf16 %v1855, %v1854
  %v1918 = vpack.c.bf16 %v1857, %v1856
  %v1919 = vpack.c.bf16 %v1859, %v1858
  %v1920 = vpack.c.bf16 %v1861, %v1860
  %v1921 = vpack.c.bf16 %v1863, %v1862
  %v1922 = vpack.c.bf16 %v1865, %v1864
  %v1923 = vpack.c.bf16 %v1867, %v1866
  %v1924 = vpack.c.bf16 %v1869, %v1868
  %v1925 = vpack.c.bf16 %v1871, %v1870
  %v1926 = vpack.c.bf16 %v1873, %v1872
  %v1927 = vpack.c.bf16 %v1875, %v1874
  %v1928 = vpack.c.bf16 %v1877, %v1876
  %v1929 = vpack.c.bf16 %v1879, %v1878
  %v1930 = vpack.c.bf16 %v1881, %v1880
  %v1931 = vpack.c.bf16 %v1883, %v1882
  %v1932 = vpack.c.bf16 %v1885, %v1884
  %v1933 = vpack.c.bf16 %v1887, %v1886
  %v1934 = vpack.c.bf16 %v1889, %v1888
  %v1935 = vpack.c.bf16 %v1891, %v1890
  %v1936 = vpack.c.bf16 %v1893, %v1892
  %v1937 = vpack.c.bf16 %v1895, %v1894
  %v1938 = vpack.c.bf16 %v1897, %v1896
  %v1939 = vpack.c.bf16 %v1899, %v1898
  %v1940 = vpack.c.bf16 %v1901, %v1900
  %v1941 = vpack.c.bf16 %v1903, %v1902
  %v1942 = vpack.c.bf16 %v1905, %v1904
  %v1943 = vpack.c.bf16 %v1907, %v1906
  %v1944 = vpack.c.bf16 %v1909, %v1908
  %v1945 = vpack.c.bf16 %v1911, %v1910
  %v1946 = vpack.c.bf16 %v1913, %v1912
  %v1947 = vpack.c.bf16 %v1915, %v1914
  %v1948 = vld [vmem:[%s7] sm:$0xff]
  %v1949 = vld [vmem:[%s7 + $0x8] sm:$0xff]
  %v1950 = vld [vmem:[%s7 + $0x10] sm:$0xff]
  %v1951 = vld [vmem:[%s7 + $0x18] sm:$0xff]
  %v1952 = vld [vmem:[%s7 + $0x20] sm:$0xff]
  %v1953 = vld [vmem:[%s7 + $0x28] sm:$0xff]
  %v1954 = vld [vmem:[%s7 + $0x30] sm:$0xff]
  %v1955 = vld [vmem:[%s7 + $0x38] sm:$0xff]
  %v1956 = vld [vmem:[%s7 + $0x40] sm:$0xff]
  %v1957 = vld [vmem:[%s7 + $0x48] sm:$0xff]
  %v1958 = vld [vmem:[%s7 + $0x50] sm:$0xff]
  %v1959 = vld [vmem:[%s7 + $0x58] sm:$0xff]
  %v1960 = vld [vmem:[%s7 + $0x60] sm:$0xff]
  %v1961 = vld [vmem:[%s7 + $0x68] sm:$0xff]
  %v1962 = vld [vmem:[%s7 + $0x70] sm:$0xff]
  %v1963 = vld [vmem:[%s7 + $0x78] sm:$0xff]
  %v1964 = vld [vmem:[%s8] sm:$0x3]
  %v1966 = vlaneseq
  %v1967 = vshrl.u32 %v1966, 7
  %v1968 = vsub.s32 0, %v1967
  %v1969 = vrot.slane %v1964, %v1968
  %v1970 = vlaneseq
  %v1971 = vshrl.u32 %v1970, 7
  %v1972 = vsub.s32 1, %v1971
  %v1973 = vrot.slane %v1964, %v1972
  %v1992 = vunpack.c.l.b16 %v1948
  %v1993 = vunpack.c.h.b16 %v1948
  %v1994 = vunpack.c.l.b16 %v1949
  %v1995 = vunpack.c.h.b16 %v1949
  %v1996 = vunpack.c.l.b16 %v1950
  %v1997 = vunpack.c.h.b16 %v1950
  %v1998 = vunpack.c.l.b16 %v1951
  %v1999 = vunpack.c.h.b16 %v1951
  %v2000 = vunpack.c.l.b16 %v1952
  %v2001 = vunpack.c.h.b16 %v1952
  %v2002 = vunpack.c.l.b16 %v1953
  %v2003 = vunpack.c.h.b16 %v1953
  %v2004 = vunpack.c.l.b16 %v1954
  %v2005 = vunpack.c.h.b16 %v1954
  %v2006 = vunpack.c.l.b16 %v1955
  %v2007 = vunpack.c.h.b16 %v1955
  %v2008 = vunpack.c.l.b16 %v1956
  %v2009 = vunpack.c.h.b16 %v1956
  %v2010 = vunpack.c.l.b16 %v1957
  %v2011 = vunpack.c.h.b16 %v1957
  %v2012 = vunpack.c.l.b16 %v1958
  %v2013 = vunpack.c.h.b16 %v1958
  %v2014 = vunpack.c.l.b16 %v1959
  %v2015 = vunpack.c.h.b16 %v1959
  %v2016 = vunpack.c.l.b16 %v1960
  %v2017 = vunpack.c.h.b16 %v1960
  %v2018 = vunpack.c.l.b16 %v1961
  %v2019 = vunpack.c.h.b16 %v1961
  %v2020 = vunpack.c.l.b16 %v1962
  %v2021 = vunpack.c.h.b16 %v1962
  %v2022 = vunpack.c.l.b16 %v1963
  %v2023 = vunpack.c.h.b16 %v1963
  %v2024 = vpack.c.b16 %v1994, %v1992
  %v2025 = vpack.c.b16 %v1995, %v1993
  %v2026 = vpack.c.b16 %v1998, %v1996
  %v2027 = vpack.c.b16 %v1999, %v1997
  %v2028 = vpack.c.b16 %v2002, %v2000
  %v2029 = vpack.c.b16 %v2003, %v2001
  %v2030 = vpack.c.b16 %v2006, %v2004
  %v2031 = vpack.c.b16 %v2007, %v2005
  %v2032 = vpack.c.b16 %v2010, %v2008
  %v2033 = vpack.c.b16 %v2011, %v2009
  %v2034 = vpack.c.b16 %v2014, %v2012
  %v2035 = vpack.c.b16 %v2015, %v2013
  %v2036 = vpack.c.b16 %v2018, %v2016
  %v2037 = vpack.c.b16 %v2019, %v2017
  %v2038 = vpack.c.b16 %v2022, %v2020
  %v2039 = vpack.c.b16 %v2023, %v2021
  %2056 = vmatprep.subr.bf16.mxu0 %v2025
  %2057 = vmatpush1.bf16.msra.mxu0 %v2024
  %2058 = vmatprep.subr.bf16.mxu0 %v2027
  %2059 = vmatpush1.bf16.msra.mxu0 %v2026
  %2060 = vmatprep.subr.bf16.mxu0 %v2029
  %2061 = vmatpush1.bf16.msra.mxu0 %v2028
  %2062 = vmatprep.subr.bf16.mxu0 %v2031
  %2063 = vmatpush1.bf16.msra.mxu0 %v2030
  %2064 = vmatprep.subr.bf16.mxu0 %v2033
  %2065 = vmatpush1.bf16.msra.mxu0 %v2032
  %2066 = vmatprep.subr.bf16.mxu0 %v2035
  %2067 = vmatpush1.bf16.msra.mxu0 %v2034
  %2068 = vmatprep.subr.bf16.mxu0 %v2037
  %2069 = vmatpush1.bf16.msra.mxu0 %v2036
  %2070 = vmatprep.subr.bf16.mxu0 %v2039
  %2071 = vmatpush1.bf16.msra.mxu0 %v2038
  %2072 = vmatprep.subr.bf16.mxu0 0
  %2073 = vmatpush1.bf16.msra.mxu0 0
  %2074 = vmatprep.subr.bf16.mxu0 0
  %2075 = vmatpush1.bf16.msra.mxu0 0
  %2076 = vmatprep.subr.bf16.mxu0 0
  %2077 = vmatpush1.bf16.msra.mxu0 0
  %2078 = vmatprep.subr.bf16.mxu0 0
  %2079 = vmatpush1.bf16.msra.mxu0 0
  %2080 = vmatprep.subr.bf16.mxu0 0
  %2081 = vmatpush1.bf16.msra.mxu0 0
  %2082 = vmatprep.subr.bf16.mxu0 0
  %2083 = vmatpush1.bf16.msra.mxu0 0
  %2084 = vmatprep.subr.bf16.mxu0 0
  %2085 = vmatpush1.bf16.msra.mxu0 0
  %2086 = vmatprep.subr.bf16.mxu0 0
  %2087 = vmatpush1.bf16.msra.mxu0 0
  %2088 = vmatprep.mubr.bf16.mxu0 0
  %2089 = vmatmul.mubr.bf16.gmra.mrb[0].mxu0 %v1916
  %v2090 = vpop.f32.mrb[0].mxu0
  %v2091 = vadd.f32 %v1969, %v2090
  %v2092 = vpop.f32.mrb[0].mxu0
  %v2093 = vadd.f32 %v1973, %v2092
  %v2094 = vpop.f32.mrb[0].mxu0
  %v2095 = vadd.f32 %v1969, %v2094
  %v2096 = vpop.f32.mrb[0].mxu0
  %v2097 = vadd.f32 %v1973, %v2096
  %2098 = vmatprep.mubr.bf16.mxu0 0
  %2099 = vmatmul.mubr.bf16.gmra.mrb[0].mxu0 %v1917
  %v2100 = vpop.f32.mrb[0].mxu0
  %v2101 = vadd.f32 %v1969, %v2100
  %v2102 = vpop.f32.mrb[0].mxu0
  %v2103 = vadd.f32 %v1973, %v2102
  %v2104 = vpop.f32.mrb[0].mxu0
  %v2105 = vadd.f32 %v1969, %v2104
  %v2106 = vpop.f32.mrb[0].mxu0
  %v2107 = vadd.f32 %v1973, %v2106
  %2108 = vmatprep.mubr.bf16.mxu0 0
  %2109 = vmatmul.mubr.bf16.gmra.mrb[0].mxu0 %v1918
  %v2110 = vpop.f32.mrb[0].mxu0
  %v2111 = vadd.f32 %v1969, %v2110
  %v2112 = vpop.f32.mrb[0].mxu0
  %v2113 = vadd.f32 %v1973, %v2112
  %v2114 = vpop.f32.mrb[0].mxu0
  %v2115 = vadd.f32 %v1969, %v2114
  %v2116 = vpop.f32.mrb[0].mxu0
  %v2117 = vadd.f32 %v1973, %v2116
  %2118 = vmatprep.mubr.bf16.mxu0 0
  %2119 = vmatmul.mubr.bf16.gmra.mrb[0].mxu0 %v1919
  %v2120 = vpop.f32.mrb[0].mxu0
  %v2121 = vadd.f32 %v1969, %v2120
  %v2122 = vpop.f32.mrb[0].mxu0
  %v2123 = vadd.f32 %v1973, %v2122
  %v2124 = vpop.f32.mrb[0].mxu0
  %v2125 = vadd.f32 %v1969, %v2124
  %v2126 = vpop.f32.mrb[0].mxu0
  %v2127 = vadd.f32 %v1973, %v2126
  %2128 = vmatprep.mubr.bf16.mxu0 0
  %2129 = vmatmul.mubr.bf16.gmra.mrb[0].mxu0 %v1920
  %v2130 = vpop.f32.mrb[0].mxu0
  %v2131 = vadd.f32 %v1969, %v2130
  %v2132 = vpop.f32.mrb[0].mxu0
  %v2133 = vadd.f32 %v1973, %v2132
  %v2134 = vpop.f32.mrb[0].mxu0
  %v2135 = vadd.f32 %v1969, %v2134
  %v2136 = vpop.f32.mrb[0].mxu0
  %v2137 = vadd.f32 %v1973, %v2136
  %2138 = vmatprep.mubr.bf16.mxu0 0
  %2139 = vmatmul.mubr.bf16.gmra.mrb[0].mxu0 %v1921
  %v2140 = vpop.f32.mrb[0].mxu0
  %v2141 = vadd.f32 %v1969, %v2140
  %v2142 = vpop.f32.mrb[0].mxu0
  %v2143 = vadd.f32 %v1973, %v2142
  %v2144 = vpop.f32.mrb[0].mxu0
  %v2145 = vadd.f32 %v1969, %v2144
  %v2146 = vpop.f32.mrb[0].mxu0
  %v2147 = vadd.f32 %v1973, %v2146
  %2148 = vmatprep.mubr.bf16.mxu0 0
  %2149 = vmatmul.mubr.bf16.gmra.mrb[0].mxu0 %v1922
  %v2150 = vpop.f32.mrb[0].mxu0
  %v2151 = vadd.f32 %v1969, %v2150
  %v2152 = vpop.f32.mrb[0].mxu0
  %v2153 = vadd.f32 %v1973, %v2152
  %v2154 = vpop.f32.mrb[0].mxu0
  %v2155 = vadd.f32 %v1969, %v2154
  %v2156 = vpop.f32.mrb[0].mxu0
  %v2157 = vadd.f32 %v1973, %v2156
  %2158 = vmatprep.mubr.bf16.mxu0 0
  %2159 = vmatmul.mubr.bf16.gmra.mrb[0].mxu0 %v1923
  %v2160 = vpop.f32.mrb[0].mxu0
  %v2161 = vadd.f32 %v1969, %v2160
  %v2162 = vpop.f32.mrb[0].mxu0
  %v2163 = vadd.f32 %v1973, %v2162
  %v2164 = vpop.f32.mrb[0].mxu0
  %v2165 = vadd.f32 %v1969, %v2164
  %v2166 = vpop.f32.mrb[0].mxu0
  %v2167 = vadd.f32 %v1973, %v2166
  %2168 = vmatprep.mubr.bf16.mxu0 0
  %2169 = vmatmul.mubr.bf16.gmra.mrb[0].mxu0 %v1924
  %v2170 = vpop.f32.mrb[0].mxu0
  %v2171 = vadd.f32 %v1969, %v2170
  %v2172 = vpop.f32.mrb[0].mxu0
  %v2173 = vadd.f32 %v1973, %v2172
  %v2174 = vpop.f32.mrb[0].mxu0
  %v2175 = vadd.f32 %v1969, %v2174
  %v2176 = vpop.f32.mrb[0].mxu0
  %v2177 = vadd.f32 %v1973, %v2176
  %2178 = vmatprep.mubr.bf16.mxu0 0
  %2179 = vmatmul.mubr.bf16.gmra.mrb[0].mxu0 %v1925
  %v2180 = vpop.f32.mrb[0].mxu0
  %v2181 = vadd.f32 %v1969, %v2180
  %v2182 = vpop.f32.mrb[0].mxu0
  %v2183 = vadd.f32 %v1973, %v2182
  %v2184 = vpop.f32.mrb[0].mxu0
  %v2185 = vadd.f32 %v1969, %v2184
  %v2186 = vpop.f32.mrb[0].mxu0
  %v2187 = vadd.f32 %v1973, %v2186
  %2188 = vmatprep.mubr.bf16.mxu0 0
  %2189 = vmatmul.mubr.bf16.gmra.mrb[0].mxu0 %v1926
  %v2190 = vpop.f32.mrb[0].mxu0
  %v2191 = vadd.f32 %v1969, %v2190
  %v2192 = vpop.f32.mrb[0].mxu0
  %v2193 = vadd.f32 %v1973, %v2192
  %v2194 = vpop.f32.mrb[0].mxu0
  %v2195 = vadd.f32 %v1969, %v2194
  %v2196 = vpop.f32.mrb[0].mxu0
  %v2197 = vadd.f32 %v1973, %v2196
  %2198 = vmatprep.mubr.bf16.mxu0 0
  %2199 = vmatmul.mubr.bf16.gmra.mrb[0].mxu0 %v1927
  %v2200 = vpop.f32.mrb[0].mxu0
  %v2201 = vadd.f32 %v1969, %v2200
  %v2202 = vpop.f32.mrb[0].mxu0
  %v2203 = vadd.f32 %v1973, %v2202
  %v2204 = vpop.f32.mrb[0].mxu0
  %v2205 = vadd.f32 %v1969, %v2204
  %v2206 = vpop.f32.mrb[0].mxu0
  %v2207 = vadd.f32 %v1973, %v2206
  %2208 = vmatprep.mubr.bf16.mxu0 0
  %2209 = vmatmul.mubr.bf16.gmra.mrb[0].mxu0 %v1928
  %v2210 = vpop.f32.mrb[0].mxu0
  %v2211 = vadd.f32 %v1969, %v2210
  %v2212 = vpop.f32.mrb[0].mxu0
  %v2213 = vadd.f32 %v1973, %v2212
  %v2214 = vpop.f32.mrb[0].mxu0
  %v2215 = vadd.f32 %v1969, %v2214
  %v2216 = vpop.f32.mrb[0].mxu0
  %v2217 = vadd.f32 %v1973, %v2216
  %2218 = vmatprep.mubr.bf16.mxu0 0
  %2219 = vmatmul.mubr.bf16.gmra.mrb[0].mxu0 %v1929
  %v2220 = vpop.f32.mrb[0].mxu0
  %v2221 = vadd.f32 %v1969, %v2220
  %v2222 = vpop.f32.mrb[0].mxu0
  %v2223 = vadd.f32 %v1973, %v2222
  %v2224 = vpop.f32.mrb[0].mxu0
  %v2225 = vadd.f32 %v1969, %v2224
  %v2226 = vpop.f32.mrb[0].mxu0
  %v2227 = vadd.f32 %v1973, %v2226
  %2228 = vmatprep.mubr.bf16.mxu0 0
  %2229 = vmatmul.mubr.bf16.gmra.mrb[0].mxu0 %v1930
  %v2230 = vpop.f32.mrb[0].mxu0
  %v2231 = vadd.f32 %v1969, %v2230
  %v2232 = vpop.f32.mrb[0].mxu0
  %v2233 = vadd.f32 %v1973, %v2232
  %v2234 = vpop.f32.mrb[0].mxu0
  %v2235 = vadd.f32 %v1969, %v2234
  %v2236 = vpop.f32.mrb[0].mxu0
  %v2237 = vadd.f32 %v1973, %v2236
  %2238 = vmatprep.mubr.bf16.mxu0 0
  %2239 = vmatmul.mubr.bf16.gmra.mrb[0].mxu0 %v1931
  %v2240 = vpop.f32.mrb[0].mxu0
  %v2241 = vadd.f32 %v1969, %v2240
  %v2242 = vpop.f32.mrb[0].mxu0
  %v2243 = vadd.f32 %v1973, %v2242
  %v2244 = vpop.f32.mrb[0].mxu0
  %v2245 = vadd.f32 %v1969, %v2244
  %v2246 = vpop.f32.mrb[0].mxu0
  %v2247 = vadd.f32 %v1973, %v2246
  %2248 = vmatprep.mubr.bf16.mxu0 0
  %2249 = vmatmul.mubr.bf16.gmra.mrb[0].mxu0 %v1932
  %v2250 = vpop.f32.mrb[0].mxu0
  %v2251 = vadd.f32 %v1969, %v2250
  %v2252 = vpop.f32.mrb[0].mxu0
  %v2253 = vadd.f32 %v1973, %v2252
  %v2254 = vpop.f32.mrb[0].mxu0
  %v2255 = vadd.f32 %v1969, %v2254
  %v2256 = vpop.f32.mrb[0].mxu0
  %v2257 = vadd.f32 %v1973, %v2256
  %2258 = vmatprep.mubr.bf16.mxu0 0
  %2259 = vmatmul.mubr.bf16.gmra.mrb[0].mxu0 %v1933
  %v2260 = vpop.f32.mrb[0].mxu0
  %v2261 = vadd.f32 %v1969, %v2260
  %v2262 = vpop.f32.mrb[0].mxu0
  %v2263 = vadd.f32 %v1973, %v2262
  %v2264 = vpop.f32.mrb[0].mxu0
  %v2265 = vadd.f32 %v1969, %v2264
  %v2266 = vpop.f32.mrb[0].mxu0
  %v2267 = vadd.f32 %v1973, %v2266
  %2268 = vmatprep.mubr.bf16.mxu0 0
  %2269 = vmatmul.mubr.bf16.gmra.mrb[0].mxu0 %v1934
  %v2270 = vpop.f32.mrb[0].mxu0
  %v2271 = vadd.f32 %v1969, %v2270
  %v2272 = vpop.f32.mrb[0].mxu0
  %v2273 = vadd.f32 %v1973, %v2272
  %v2274 = vpop.f32.mrb[0].mxu0
  %v2275 = vadd.f32 %v1969, %v2274
  %v2276 = vpop.f32.mrb[0].mxu0
  %v2277 = vadd.f32 %v1973, %v2276
  %2278 = vmatprep.mubr.bf16.mxu0 0
  %2279 = vmatmul.mubr.bf16.gmra.mrb[0].mxu0 %v1935
  %v2280 = vpop.f32.mrb[0].mxu0
  %v2281 = vadd.f32 %v1969, %v2280
  %v2282 = vpop.f32.mrb[0].mxu0
  %v2283 = vadd.f32 %v1973, %v2282
  %v2284 = vpop.f32.mrb[0].mxu0
  %v2285 = vadd.f32 %v1969, %v2284
  %v2286 = vpop.f32.mrb[0].mxu0
  %v2287 = vadd.f32 %v1973, %v2286
  %2288 = vmatprep.mubr.bf16.mxu0 0
  %2289 = vmatmul.mubr.bf16.gmra.mrb[0].mxu0 %v1936
  %v2290 = vpop.f32.mrb[0].mxu0
  %v2291 = vadd.f32 %v1969, %v2290
  %v2292 = vpop.f32.mrb[0].mxu0
  %v2293 = vadd.f32 %v1973, %v2292
  %v2294 = vpop.f32.mrb[0].mxu0
  %v2295 = vadd.f32 %v1969, %v2294
  %v2296 = vpop.f32.mrb[0].mxu0
  %v2297 = vadd.f32 %v1973, %v2296
  %2298 = vmatprep.mubr.bf16.mxu0 0
  %2299 = vmatmul.mubr.bf16.gmra.mrb[0].mxu0 %v1937
  %v2300 = vpop.f32.mrb[0].mxu0
  %v2301 = vadd.f32 %v1969, %v2300
  %v2302 = vpop.f32.mrb[0].mxu0
  %v2303 = vadd.f32 %v1973, %v2302
  %v2304 = vpop.f32.mrb[0].mxu0
  %v2305 = vadd.f32 %v1969, %v2304
  %v2306 = vpop.f32.mrb[0].mxu0
  %v2307 = vadd.f32 %v1973, %v2306
  %2308 = vmatprep.mubr.bf16.mxu0 0
  %2309 = vmatmul.mubr.bf16.gmra.mrb[0].mxu0 %v1938
  %v2310 = vpop.f32.mrb[0].mxu0
  %v2311 = vadd.f32 %v1969, %v2310
  %v2312 = vpop.f32.mrb[0].mxu0
  %v2313 = vadd.f32 %v1973, %v2312
  %v2314 = vpop.f32.mrb[0].mxu0
  %v2315 = vadd.f32 %v1969, %v2314
  %v2316 = vpop.f32.mrb[0].mxu0
  %v2317 = vadd.f32 %v1973, %v2316
  %2318 = vmatprep.mubr.bf16.mxu0 0
  %2319 = vmatmul.mubr.bf16.gmra.mrb[0].mxu0 %v1939
  %v2320 = vpop.f32.mrb[0].mxu0
  %v2321 = vadd.f32 %v1969, %v2320
  %v2322 = vpop.f32.mrb[0].mxu0
  %v2323 = vadd.f32 %v1973, %v2322
  %v2324 = vpop.f32.mrb[0].mxu0
  %v2325 = vadd.f32 %v1969, %v2324
  %v2326 = vpop.f32.mrb[0].mxu0
  %v2327 = vadd.f32 %v1973, %v2326
  %2328 = vmatprep.mubr.bf16.mxu0 0
  %2329 = vmatmul.mubr.bf16.gmra.mrb[0].mxu0 %v1940
  %v2330 = vpop.f32.mrb[0].mxu0
  %v2331 = vadd.f32 %v1969, %v2330
  %v2332 = vpop.f32.mrb[0].mxu0
  %v2333 = vadd.f32 %v1973, %v2332
  %v2334 = vpop.f32.mrb[0].mxu0
  %v2335 = vadd.f32 %v1969, %v2334
  %v2336 = vpop.f32.mrb[0].mxu0
  %v2337 = vadd.f32 %v1973, %v2336
  %2338 = vmatprep.mubr.bf16.mxu0 0
  %2339 = vmatmul.mubr.bf16.gmra.mrb[0].mxu0 %v1941
  %v2340 = vpop.f32.mrb[0].mxu0
  %v2341 = vadd.f32 %v1969, %v2340
  %v2342 = vpop.f32.mrb[0].mxu0
  %v2343 = vadd.f32 %v1973, %v2342
  %v2344 = vpop.f32.mrb[0].mxu0
  %v2345 = vadd.f32 %v1969, %v2344
  %v2346 = vpop.f32.mrb[0].mxu0
  %v2347 = vadd.f32 %v1973, %v2346
  %2348 = vmatprep.mubr.bf16.mxu0 0
  %2349 = vmatmul.mubr.bf16.gmra.mrb[0].mxu0 %v1942
  %v2350 = vpop.f32.mrb[0].mxu0
  %v2351 = vadd.f32 %v1969, %v2350
  %v2352 = vpop.f32.mrb[0].mxu0
  %v2353 = vadd.f32 %v1973, %v2352
  %v2354 = vpop.f32.mrb[0].mxu0
  %v2355 = vadd.f32 %v1969, %v2354
  %v2356 = vpop.f32.mrb[0].mxu0
  %v2357 = vadd.f32 %v1973, %v2356
  %2358 = vmatprep.mubr.bf16.mxu0 0
  %2359 = vmatmul.mubr.bf16.gmra.mrb[0].mxu0 %v1943
  %v2360 = vpop.f32.mrb[0].mxu0
  %v2361 = vadd.f32 %v1969, %v2360
  %v2362 = vpop.f32.mrb[0].mxu0
  %v2363 = vadd.f32 %v1973, %v2362
  %v2364 = vpop.f32.mrb[0].mxu0
  %v2365 = vadd.f32 %v1969, %v2364
  %v2366 = vpop.f32.mrb[0].mxu0
  %v2367 = vadd.f32 %v1973, %v2366
  %2368 = vmatprep.mubr.bf16.mxu0 0
  %2369 = vmatmul.mubr.bf16.gmra.mrb[0].mxu0 %v1944
  %v2370 = vpop.f32.mrb[0].mxu0
  %v2371 = vadd.f32 %v1969, %v2370
  %v2372 = vpop.f32.mrb[0].mxu0
  %v2373 = vadd.f32 %v1973, %v2372
  %v2374 = vpop.f32.mrb[0].mxu0
  %v2375 = vadd.f32 %v1969, %v2374
  %v2376 = vpop.f32.mrb[0].mxu0
  %v2377 = vadd.f32 %v1973, %v2376
  %2378 = vmatprep.mubr.bf16.mxu0 0
  %2379 = vmatmul.mubr.bf16.gmra.mrb[0].mxu0 %v1945
  %v2380 = vpop.f32.mrb[0].mxu0
  %v2381 = vadd.f32 %v1969, %v2380
  %v2382 = vpop.f32.mrb[0].mxu0
  %v2383 = vadd.f32 %v1973, %v2382
  %v2384 = vpop.f32.mrb[0].mxu0
  %v2385 = vadd.f32 %v1969, %v2384
  %v2386 = vpop.f32.mrb[0].mxu0
  %v2387 = vadd.f32 %v1973, %v2386
  %2388 = vmatprep.mubr.bf16.mxu0 0
  %2389 = vmatmul.mubr.bf16.gmra.mrb[0].mxu0 %v1946
  %v2390 = vpop.f32.mrb[0].mxu0
  %v2391 = vadd.f32 %v1969, %v2390
  %v2392 = vpop.f32.mrb[0].mxu0
  %v2393 = vadd.f32 %v1973, %v2392
  %v2394 = vpop.f32.mrb[0].mxu0
  %v2395 = vadd.f32 %v1969, %v2394
  %v2396 = vpop.f32.mrb[0].mxu0
  %v2397 = vadd.f32 %v1973, %v2396
  %2398 = vmatprep.mubr.bf16.mxu0 0
  %2399 = vmatmul.mubr.bf16.gmra.mrb[0].mxu0 %v1947
  %v2400 = vpop.f32.mrb[0].mxu0
  %v2401 = vadd.f32 %v1969, %v2400
  %v2402 = vpop.f32.mrb[0].mxu0
  %v2403 = vadd.f32 %v1973, %v2402
  %v2404 = vpop.f32.mrb[0].mxu0
  %v2405 = vadd.f32 %v1969, %v2404
  %v2406 = vpop.f32.mrb[0].mxu0
  %v2407 = vadd.f32 %v1973, %v2406
  %2408 = vdwg.mxu0
  %v2409 = vmax.f32 %v2091, 0.0
  %v2410 = vmax.f32 %v2093, 0.0
  %v2411 = vmax.f32 %v2095, 0.0
  %v2412 = vmax.f32 %v2097, 0.0
  %v2413 = vmax.f32 %v2101, 0.0
  %v2414 = vmax.f32 %v2103, 0.0
  %v2415 = vmax.f32 %v2105, 0.0
  %v2416 = vmax.f32 %v2107, 0.0
  %v2417 = vmax.f32 %v2111, 0.0
  %v2418 = vmax.f32 %v2113, 0.0
  %v2419 = vmax.f32 %v2115, 0.0
  %v2420 = vmax.f32 %v2117, 0.0
  %v2421 = vmax.f32 %v2121, 0.0
  %v2422 = vmax.f32 %v2123, 0.0
  %v2423 = vmax.f32 %v2125, 0.0
  %v2424 = vmax.f32 %v2127, 0.0
  %v2425 = vmax.f32 %v2131, 0.0
  %v2426 = vmax.f32 %v2133, 0.0
  %v2427 = vmax.f32 %v2135, 0.0
  %v2428 = vmax.f32 %v2137, 0.0
  %v2429 = vmax.f32 %v2141, 0.0
  %v2430 = vmax.f32 %v2143, 0.0
  %v2431 = vmax.f32 %v2145, 0.0
  %v2432 = vmax.f32 %v2147, 0.0
  %v2433 = vmax.f32 %v2151, 0.0
  %v2434 = vmax.f32 %v2153, 0.0
  %v2435 = vmax.f32 %v2155, 0.0
  %v2436 = vmax.f32 %v2157, 0.0
  %v2437 = vmax.f32 %v2161, 0.0
  %v2438 = vmax.f32 %v2163, 0.0
  %v2439 = vmax.f32 %v2165, 0.0
  %v2440 = vmax.f32 %v2167, 0.0
  %v2441 = vmax.f32 %v2171, 0.0
  %v2442 = vmax.f32 %v2173, 0.0
  %v2443 = vmax.f32 %v2175, 0.0
  %v2444 = vmax.f32 %v2177, 0.0
  %v2445 = vmax.f32 %v2181, 0.0
  %v2446 = vmax.f32 %v2183, 0.0
  %v2447 = vmax.f32 %v2185, 0.0
  %v2448 = vmax.f32 %v2187, 0.0
  %v2449 = vmax.f32 %v2191, 0.0
  %v2450 = vmax.f32 %v2193, 0.0
  %v2451 = vmax.f32 %v2195, 0.0
  %v2452 = vmax.f32 %v2197, 0.0
  %v2453 = vmax.f32 %v2201, 0.0
  %v2454 = vmax.f32 %v2203, 0.0
  %v2455 = vmax.f32 %v2205, 0.0
  %v2456 = vmax.f32 %v2207, 0.0
  %v2457 = vmax.f32 %v2211, 0.0
  %v2458 = vmax.f32 %v2213, 0.0
  %v2459 = vmax.f32 %v2215, 0.0
  %v2460 = vmax.f32 %v2217, 0.0
  %v2461 = vmax.f32 %v2221, 0.0
  %v2462 = vmax.f32 %v2223, 0.0
  %v2463 = vmax.f32 %v2225, 0.0
  %v2464 = vmax.f32 %v2227, 0.0
  %v2465 = vmax.f32 %v2231, 0.0
  %v2466 = vmax.f32 %v2233, 0.0
  %v2467 = vmax.f32 %v2235, 0.0
  %v2468 = vmax.f32 %v2237, 0.0
  %v2469 = vmax.f32 %v2241, 0.0
  %v2470 = vmax.f32 %v2243, 0.0
  %v2471 = vmax.f32 %v2245, 0.0
  %v2472 = vmax.f32 %v2247, 0.0
  %v2473 = vmax.f32 %v2251, 0.0
  %v2474 = vmax.f32 %v2253, 0.0
  %v2475 = vmax.f32 %v2255, 0.0
  %v2476 = vmax.f32 %v2257, 0.0
  %v2477 = vmax.f32 %v2261, 0.0
  %v2478 = vmax.f32 %v2263, 0.0
  %v2479 = vmax.f32 %v2265, 0.0
  %v2480 = vmax.f32 %v2267, 0.0
  %v2481 = vmax.f32 %v2271, 0.0
  %v2482 = vmax.f32 %v2273, 0.0
  %v2483 = vmax.f32 %v2275, 0.0
  %v2484 = vmax.f32 %v2277, 0.0
  %v2485 = vmax.f32 %v2281, 0.0
  %v2486 = vmax.f32 %v2283, 0.0
  %v2487 = vmax.f32 %v2285, 0.0
  %v2488 = vmax.f32 %v2287, 0.0
  %v2489 = vmax.f32 %v2291, 0.0
  %v2490 = vmax.f32 %v2293, 0.0
  %v2491 = vmax.f32 %v2295, 0.0
  %v2492 = vmax.f32 %v2297, 0.0
  %v2493 = vmax.f32 %v2301, 0.0
  %v2494 = vmax.f32 %v2303, 0.0
  %v2495 = vmax.f32 %v2305, 0.0
  %v2496 = vmax.f32 %v2307, 0.0
  %v2497 = vmax.f32 %v2311, 0.0
  %v2498 = vmax.f32 %v2313, 0.0
  %v2499 = vmax.f32 %v2315, 0.0
  %v2500 = vmax.f32 %v2317, 0.0
  %v2501 = vmax.f32 %v2321, 0.0
  %v2502 = vmax.f32 %v2323, 0.0
  %v2503 = vmax.f32 %v2325, 0.0
  %v2504 = vmax.f32 %v2327, 0.0
  %v2505 = vmax.f32 %v2331, 0.0
  %v2506 = vmax.f32 %v2333, 0.0
  %v2507 = vmax.f32 %v2335, 0.0
  %v2508 = vmax.f32 %v2337, 0.0
  %v2509 = vmax.f32 %v2341, 0.0
  %v2510 = vmax.f32 %v2343, 0.0
  %v2511 = vmax.f32 %v2345, 0.0
  %v2512 = vmax.f32 %v2347, 0.0
  %v2513 = vmax.f32 %v2351, 0.0
  %v2514 = vmax.f32 %v2353, 0.0
  %v2515 = vmax.f32 %v2355, 0.0
  %v2516 = vmax.f32 %v2357, 0.0
  %v2517 = vmax.f32 %v2361, 0.0
  %v2518 = vmax.f32 %v2363, 0.0
  %v2519 = vmax.f32 %v2365, 0.0
  %v2520 = vmax.f32 %v2367, 0.0
  %v2521 = vmax.f32 %v2371, 0.0
  %v2522 = vmax.f32 %v2373, 0.0
  %v2523 = vmax.f32 %v2375, 0.0
  %v2524 = vmax.f32 %v2377, 0.0
  %v2525 = vmax.f32 %v2381, 0.0
  %v2526 = vmax.f32 %v2383, 0.0
  %v2527 = vmax.f32 %v2385, 0.0
  %v2528 = vmax.f32 %v2387, 0.0
  %v2529 = vmax.f32 %v2391, 0.0
  %v2530 = vmax.f32 %v2393, 0.0
  %v2531 = vmax.f32 %v2395, 0.0
  %v2532 = vmax.f32 %v2397, 0.0
  %v2533 = vmax.f32 %v2401, 0.0
  %v2534 = vmax.f32 %v2403, 0.0
  %v2535 = vmax.f32 %v2405, 0.0
  %v2536 = vmax.f32 %v2407, 0.0
  %v2537 = vpack.c.bf16 %v2411, %v2409
  %v2538 = vpack.c.bf16 %v2412, %v2410
  %v2539 = vpack.c.bf16 %v2415, %v2413
  %v2540 = vpack.c.bf16 %v2416, %v2414
  %v2541 = vpack.c.bf16 %v2419, %v2417
  %v2542 = vpack.c.bf16 %v2420, %v2418
  %v2543 = vpack.c.bf16 %v2423, %v2421
  %v2544 = vpack.c.bf16 %v2424, %v2422
  %v2545 = vpack.c.bf16 %v2427, %v2425
  %v2546 = vpack.c.bf16 %v2428, %v2426
  %v2547 = vpack.c.bf16 %v2431, %v2429
  %v2548 = vpack.c.bf16 %v2432, %v2430
  %v2549 = vpack.c.bf16 %v2435, %v2433
  %v2550 = vpack.c.bf16 %v2436, %v2434
  %v2551 = vpack.c.bf16 %v2439, %v2437
  %v2552 = vpack.c.bf16 %v2440, %v2438
  %v2553 = vpack.c.bf16 %v2443, %v2441
  %v2554 = vpack.c.bf16 %v2444, %v2442
  %v2555 = vpack.c.bf16 %v2447, %v2445
  %v2556 = vpack.c.bf16 %v2448, %v2446
  %v2557 = vpack.c.bf16 %v2451, %v2449
  %v2558 = vpack.c.bf16 %v2452, %v2450
  %v2559 = vpack.c.bf16 %v2455, %v2453
  %v2560 = vpack.c.bf16 %v2456, %v2454
  %v2561 = vpack.c.bf16 %v2459, %v2457
  %v2562 = vpack.c.bf16 %v2460, %v2458
  %v2563 = vpack.c.bf16 %v2463, %v2461
  %v2564 = vpack.c.bf16 %v2464, %v2462
  %v2565 = vpack.c.bf16 %v2467, %v2465
  %v2566 = vpack.c.bf16 %v2468, %v2466
  %v2567 = vpack.c.bf16 %v2471, %v2469
  %v2568 = vpack.c.bf16 %v2472, %v2470
  %v2569 = vpack.c.bf16 %v2475, %v2473
  %v2570 = vpack.c.bf16 %v2476, %v2474
  %v2571 = vpack.c.bf16 %v2479, %v2477
  %v2572 = vpack.c.bf16 %v2480, %v2478
  %v2573 = vpack.c.bf16 %v2483, %v2481
  %v2574 = vpack.c.bf16 %v2484, %v2482
  %v2575 = vpack.c.bf16 %v2487, %v2485
  %v2576 = vpack.c.bf16 %v2488, %v2486
  %v2577 = vpack.c.bf16 %v2491, %v2489
  %v2578 = vpack.c.bf16 %v2492, %v2490
  %v2579 = vpack.c.bf16 %v2495, %v2493
  %v2580 = vpack.c.bf16 %v2496, %v2494
  %v2581 = vpack.c.bf16 %v2499, %v2497
  %v2582 = vpack.c.bf16 %v2500, %v2498
  %v2583 = vpack.c.bf16 %v2503, %v2501
  %v2584 = vpack.c.bf16 %v2504, %v2502
  %v2585 = vpack.c.bf16 %v2507, %v2505
  %v2586 = vpack.c.bf16 %v2508, %v2506
  %v2587 = vpack.c.bf16 %v2511, %v2509
  %v2588 = vpack.c.bf16 %v2512, %v2510
  %v2589 = vpack.c.bf16 %v2515, %v2513
  %v2590 = vpack.c.bf16 %v2516, %v2514
  %v2591 = vpack.c.bf16 %v2519, %v2517
  %v2592 = vpack.c.bf16 %v2520, %v2518
  %v2593 = vpack.c.bf16 %v2523, %v2521
  %v2594 = vpack.c.bf16 %v2524, %v2522
  %v2595 = vpack.c.bf16 %v2527, %v2525
  %v2596 = vpack.c.bf16 %v2528, %v2526
  %v2597 = vpack.c.bf16 %v2531, %v2529
  %v2598 = vpack.c.bf16 %v2532, %v2530
  %v2599 = vpack.c.bf16 %v2535, %v2533
  %v2600 = vpack.c.bf16 %v2536, %v2534
  %v2665 = vunpack.c.l.b16 %v2537
  %v2666 = vunpack.c.l.b16 %v2538
  %v2667 = vunpack.c.h.b16 %v2537
  %v2668 = vunpack.c.h.b16 %v2538
  %v2669 = vunpack.c.l.b16 %v2539
  %v2670 = vunpack.c.l.b16 %v2540
  %v2671 = vunpack.c.h.b16 %v2539
  %v2672 = vunpack.c.h.b16 %v2540
  %v2673 = vunpack.c.l.b16 %v2541
  %v2674 = vunpack.c.l.b16 %v2542
  %v2675 = vunpack.c.h.b16 %v2541
  %v2676 = vunpack.c.h.b16 %v2542
  %v2677 = vunpack.c.l.b16 %v2543
  %v2678 = vunpack.c.l.b16 %v2544
  %v2679 = vunpack.c.h.b16 %v2543
  %v2680 = vunpack.c.h.b16 %v2544
  %v2681 = vunpack.c.l.b16 %v2545
  %v2682 = vunpack.c.l.b16 %v2546
  %v2683 = vunpack.c.h.b16 %v2545
  %v2684 = vunpack.c.h.b16 %v2546
  %v2685 = vunpack.c.l.b16 %v2547
  %v2686 = vunpack.c.l.b16 %v2548
  %v2687 = vunpack.c.h.b16 %v2547
  %v2688 = vunpack.c.h.b16 %v2548
  %v2689 = vunpack.c.l.b16 %v2549
  %v2690 = vunpack.c.l.b16 %v2550
  %v2691 = vunpack.c.h.b16 %v2549
  %v2692 = vunpack.c.h.b16 %v2550
  %v2693 = vunpack.c.l.b16 %v2551
  %v2694 = vunpack.c.l.b16 %v2552
  %v2695 = vunpack.c.h.b16 %v2551
  %v2696 = vunpack.c.h.b16 %v2552
  %v2697 = vunpack.c.l.b16 %v2553
  %v2698 = vunpack.c.l.b16 %v2554
  %v2699 = vunpack.c.h.b16 %v2553
  %v2700 = vunpack.c.h.b16 %v2554
  %v2701 = vunpack.c.l.b16 %v2555
  %v2702 = vunpack.c.l.b16 %v2556
  %v2703 = vunpack.c.h.b16 %v2555
  %v2704 = vunpack.c.h.b16 %v2556
  %v2705 = vunpack.c.l.b16 %v2557
  %v2706 = vunpack.c.l.b16 %v2558
  %v2707 = vunpack.c.h.b16 %v2557
  %v2708 = vunpack.c.h.b16 %v2558
  %v2709 = vunpack.c.l.b16 %v2559
  %v2710 = vunpack.c.l.b16 %v2560
  %v2711 = vunpack.c.h.b16 %v2559
  %v2712 = vunpack.c.h.b16 %v2560
  %v2713 = vunpack.c.l.b16 %v2561
  %v2714 = vunpack.c.l.b16 %v2562
  %v2715 = vunpack.c.h.b16 %v2561
  %v2716 = vunpack.c.h.b16 %v2562
  %v2717 = vunpack.c.l.b16 %v2563
  %v2718 = vunpack.c.l.b16 %v2564
  %v2719 = vunpack.c.h.b16 %v2563
  %v2720 = vunpack.c.h.b16 %v2564
  %v2721 = vunpack.c.l.b16 %v2565
  %v2722 = vunpack.c.l.b16 %v2566
  %v2723 = vunpack.c.h.b16 %v2565
  %v2724 = vunpack.c.h.b16 %v2566
  %v2725 = vunpack.c.l.b16 %v2567
  %v2726 = vunpack.c.l.b16 %v2568
  %v2727 = vunpack.c.h.b16 %v2567
  %v2728 = vunpack.c.h.b16 %v2568
  %v2729 = vunpack.c.l.b16 %v2569
  %v2730 = vunpack.c.l.b16 %v2570
  %v2731 = vunpack.c.h.b16 %v2569
  %v2732 = vunpack.c.h.b16 %v2570
  %v2733 = vunpack.c.l.b16 %v2571
  %v2734 = vunpack.c.l.b16 %v2572
  %v2735 = vunpack.c.h.b16 %v2571
  %v2736 = vunpack.c.h.b16 %v2572
  %v2737 = vunpack.c.l.b16 %v2573
  %v2738 = vunpack.c.l.b16 %v2574
  %v2739 = vunpack.c.h.b16 %v2573
  %v2740 = vunpack.c.h.b16 %v2574
  %v2741 = vunpack.c.l.b16 %v2575
  %v2742 = vunpack.c.l.b16 %v2576
  %v2743 = vunpack.c.h.b16 %v2575
  %v2744 = vunpack.c.h.b16 %v2576
  %v2745 = vunpack.c.l.b16 %v2577
  %v2746 = vunpack.c.l.b16 %v2578
  %v2747 = vunpack.c.h.b16 %v2577
  %v2748 = vunpack.c.h.b16 %v2578
  %v2749 = vunpack.c.l.b16 %v2579
  %v2750 = vunpack.c.l.b16 %v2580
  %v2751 = vunpack.c.h.b16 %v2579
  %v2752 = vunpack.c.h.b16 %v2580
  %v2753 = vunpack.c.l.b16 %v2581
  %v2754 = vunpack.c.l.b16 %v2582
  %v2755 = vunpack.c.h.b16 %v2581
  %v2756 = vunpack.c.h.b16 %v2582
  %v2757 = vunpack.c.l.b16 %v2583
  %v2758 = vunpack.c.l.b16 %v2584
  %v2759 = vunpack.c.h.b16 %v2583
  %v2760 = vunpack.c.h.b16 %v2584
  %v2761 = vunpack.c.l.b16 %v2585
  %v2762 = vunpack.c.l.b16 %v2586
  %v2763 = vunpack.c.h.b16 %v2585
  %v2764 = vunpack.c.h.b16 %v2586
  %v2765 = vunpack.c.l.b16 %v2587
  %v2766 = vunpack.c.l.b16 %v2588
  %v2767 = vunpack.c.h.b16 %v2587
  %v2768 = vunpack.c.h.b16 %v2588
  %v2769 = vunpack.c.l.b16 %v2589
  %v2770 = vunpack.c.l.b16 %v2590
  %v2771 = vunpack.c.h.b16 %v2589
  %v2772 = vunpack.c.h.b16 %v2590
  %v2773 = vunpack.c.l.b16 %v2591
  %v2774 = vunpack.c.l.b16 %v2592
  %v2775 = vunpack.c.h.b16 %v2591
  %v2776 = vunpack.c.h.b16 %v2592
  %v2777 = vunpack.c.l.b16 %v2593
  %v2778 = vunpack.c.l.b16 %v2594
  %v2779 = vunpack.c.h.b16 %v2593
  %v2780 = vunpack.c.h.b16 %v2594
  %v2781 = vunpack.c.l.b16 %v2595
  %v2782 = vunpack.c.l.b16 %v2596
  %v2783 = vunpack.c.h.b16 %v2595
  %v2784 = vunpack.c.h.b16 %v2596
  %v2785 = vunpack.c.l.b16 %v2597
  %v2786 = vunpack.c.l.b16 %v2598
  %v2787 = vunpack.c.h.b16 %v2597
  %v2788 = vunpack.c.h.b16 %v2598
  %v2789 = vunpack.c.l.b16 %v2599
  %v2790 = vunpack.c.l.b16 %v2600
  %v2791 = vunpack.c.h.b16 %v2599
  %v2792 = vunpack.c.h.b16 %v2600
  %v2793 = vpack.c.b16 %v2666, %v2665
  %v2794 = vpack.c.b16 %v2668, %v2667
  %v2795 = vpack.c.b16 %v2670, %v2669
  %v2796 = vpack.c.b16 %v2672, %v2671
  %v2797 = vpack.c.b16 %v2674, %v2673
  %v2798 = vpack.c.b16 %v2676, %v2675
  %v2799 = vpack.c.b16 %v2678, %v2677
  %v2800 = vpack.c.b16 %v2680, %v2679
  %v2801 = vpack.c.b16 %v2682, %v2681
  %v2802 = vpack.c.b16 %v2684, %v2683
  %v2803 = vpack.c.b16 %v2686, %v2685
  %v2804 = vpack.c.b16 %v2688, %v2687
  %v2805 = vpack.c.b16 %v2690, %v2689
  %v2806 = vpack.c.b16 %v2692, %v2691
  %v2807 = vpack.c.b16 %v2694, %v2693
  %v2808 = vpack.c.b16 %v2696, %v2695
  %v2809 = vpack.c.b16 %v2698, %v2697
  %v2810 = vpack.c.b16 %v2700, %v2699
  %v2811 = vpack.c.b16 %v2702, %v2701
  %v2812 = vpack.c.b16 %v2704, %v2703
  %v2813 = vpack.c.b16 %v2706, %v2705
  %v2814 = vpack.c.b16 %v2708, %v2707
  %v2815 = vpack.c.b16 %v2710, %v2709
  %v2816 = vpack.c.b16 %v2712, %v2711
  %v2817 = vpack.c.b16 %v2714, %v2713
  %v2818 = vpack.c.b16 %v2716, %v2715
  %v2819 = vpack.c.b16 %v2718, %v2717
  %v2820 = vpack.c.b16 %v2720, %v2719
  %v2821 = vpack.c.b16 %v2722, %v2721
  %v2822 = vpack.c.b16 %v2724, %v2723
  %v2823 = vpack.c.b16 %v2726, %v2725
  %v2824 = vpack.c.b16 %v2728, %v2727
  %v2825 = vpack.c.b16 %v2730, %v2729
  %v2826 = vpack.c.b16 %v2732, %v2731
  %v2827 = vpack.c.b16 %v2734, %v2733
  %v2828 = vpack.c.b16 %v2736, %v2735
  %v2829 = vpack.c.b16 %v2738, %v2737
  %v2830 = vpack.c.b16 %v2740, %v2739
  %v2831 = vpack.c.b16 %v2742, %v2741
  %v2832 = vpack.c.b16 %v2744, %v2743
  %v2833 = vpack.c.b16 %v2746, %v2745
  %v2834 = vpack.c.b16 %v2748, %v2747
  %v2835 = vpack.c.b16 %v2750, %v2749
  %v2836 = vpack.c.b16 %v2752, %v2751
  %v2837 = vpack.c.b16 %v2754, %v2753
  %v2838 = vpack.c.b16 %v2756, %v2755
  %v2839 = vpack.c.b16 %v2758, %v2757
  %v2840 = vpack.c.b16 %v2760, %v2759
  %v2841 = vpack.c.b16 %v2762, %v2761
  %v2842 = vpack.c.b16 %v2764, %v2763
  %v2843 = vpack.c.b16 %v2766, %v2765
  %v2844 = vpack.c.b16 %v2768, %v2767
  %v2845 = vpack.c.b16 %v2770, %v2769
  %v2846 = vpack.c.b16 %v2772, %v2771
  %v2847 = vpack.c.b16 %v2774, %v2773
  %v2848 = vpack.c.b16 %v2776, %v2775
  %v2849 = vpack.c.b16 %v2778, %v2777
  %v2850 = vpack.c.b16 %v2780, %v2779
  %v2851 = vpack.c.b16 %v2782, %v2781
  %v2852 = vpack.c.b16 %v2784, %v2783
  %v2853 = vpack.c.b16 %v2786, %v2785
  %v2854 = vpack.c.b16 %v2788, %v2787
  %v2855 = vpack.c.b16 %v2790, %v2789
  %v2856 = vpack.c.b16 %v2792, %v2791
  %2921 = vst [vmem:[%s9] sm:$0xff] %v2793
  %2922 = vst [vmem:[%s9 + $0x8] sm:$0xff] %v2794
  %2923 = vst [vmem:[%s9 + $0x10] sm:$0xff] %v2795
  %2924 = vst [vmem:[%s9 + $0x18] sm:$0xff] %v2796
  %2925 = vst [vmem:[%s9 + $0x20] sm:$0xff] %v2797
  %2926 = vst [vmem:[%s9 + $0x28] sm:$0xff] %v2798
  %2927 = vst [vmem:[%s9 + $0x30] sm:$0xff] %v2799
  %2928 = vst [vmem:[%s9 + $0x38] sm:$0xff] %v2800
  %2929 = vst [vmem:[%s9 + $0x40] sm:$0xff] %v2801
  %2930 = vst [vmem:[%s9 + $0x48] sm:$0xff] %v2802
  %2931 = vst [vmem:[%s9 + $0x50] sm:$0xff] %v2803
  %2932 = vst [vmem:[%s9 + $0x58] sm:$0xff] %v2804
  %2933 = vst [vmem:[%s9 + $0x60] sm:$0xff] %v2805
  %2934 = vst [vmem:[%s9 + $0x68] sm:$0xff] %v2806
  %2935 = vst [vmem:[%s9 + $0x70] sm:$0xff] %v2807
  %2936 = vst [vmem:[%s9 + $0x78] sm:$0xff] %v2808
  %2937 = vst [vmem:[%s9 + $0x80] sm:$0xff] %v2809
  %2938 = vst [vmem:[%s9 + $0x88] sm:$0xff] %v2810
  %2939 = vst [vmem:[%s9 + $0x90] sm:$0xff] %v2811
  %2940 = vst [vmem:[%s9 + $0x98] sm:$0xff] %v2812
  %2941 = vst [vmem:[%s9 + $0xa0] sm:$0xff] %v2813
  %2942 = vst [vmem:[%s9 + $0xa8] sm:$0xff] %v2814
  %2943 = vst [vmem:[%s9 + $0xb0] sm:$0xff] %v2815
  %2944 = vst [vmem:[%s9 + $0xb8] sm:$0xff] %v2816
  %2945 = vst [vmem:[%s9 + $0xc0] sm:$0xff] %v2817
  %2946 = vst [vmem:[%s9 + $0xc8] sm:$0xff] %v2818
  %2947 = vst [vmem:[%s9 + $0xd0] sm:$0xff] %v2819
  %2948 = vst [vmem:[%s9 + $0xd8] sm:$0xff] %v2820
  %2949 = vst [vmem:[%s9 + $0xe0] sm:$0xff] %v2821
  %2950 = vst [vmem:[%s9 + $0xe8] sm:$0xff] %v2822
  %2951 = vst [vmem:[%s9 + $0xf0] sm:$0xff] %v2823
  %2952 = vst [vmem:[%s9 + $0xf8] sm:$0xff] %v2824
  %2953 = vst [vmem:[%s9 + $0x100] sm:$0xff] %v2825
  %2954 = vst [vmem:[%s9 + $0x108] sm:$0xff] %v2826
  %2955 = vst [vmem:[%s9 + $0x110] sm:$0xff] %v2827
  %2956 = vst [vmem:[%s9 + $0x118] sm:$0xff] %v2828
  %2957 = vst [vmem:[%s9 + $0x120] sm:$0xff] %v2829
  %2958 = vst [vmem:[%s9 + $0x128] sm:$0xff] %v2830
  %2959 = vst [vmem:[%s9 + $0x130] sm:$0xff] %v2831
  %2960 = vst [vmem:[%s9 + $0x138] sm:$0xff] %v2832
  %2961 = vst [vmem:[%s9 + $0x140] sm:$0xff] %v2833
  %2962 = vst [vmem:[%s9 + $0x148] sm:$0xff] %v2834
  %2963 = vst [vmem:[%s9 + $0x150] sm:$0xff] %v2835
  %2964 = vst [vmem:[%s9 + $0x158] sm:$0xff] %v2836
  %2965 = vst [vmem:[%s9 + $0x160] sm:$0xff] %v2837
  %2966 = vst [vmem:[%s9 + $0x168] sm:$0xff] %v2838
  %2967 = vst [vmem:[%s9 + $0x170] sm:$0xff] %v2839
  %2968 = vst [vmem:[%s9 + $0x178] sm:$0xff] %v2840
  %2969 = vst [vmem:[%s9 + $0x180] sm:$0xff] %v2841
  %2970 = vst [vmem:[%s9 + $0x188] sm:$0xff] %v2842
  %2971 = vst [vmem:[%s9 + $0x190] sm:$0xff] %v2843
  %2972 = vst [vmem:[%s9 + $0x198] sm:$0xff] %v2844
  %2973 = vst [vmem:[%s9 + $0x1a0] sm:$0xff] %v2845
  %2974 = vst [vmem:[%s9 + $0x1a8] sm:$0xff] %v2846
  %2975 = vst [vmem:[%s9 + $0x1b0] sm:$0xff] %v2847
  %2976 = vst [vmem:[%s9 + $0x1b8] sm:$0xff] %v2848
  %2977 = vst [vmem:[%s9 + $0x1c0] sm:$0xff] %v2849
  %2978 = vst [vmem:[%s9 + $0x1c8] sm:$0xff] %v2850
  %2979 = vst [vmem:[%s9 + $0x1d0] sm:$0xff] %v2851
  %2980 = vst [vmem:[%s9 + $0x1d8] sm:$0xff] %v2852
  %2981 = vst [vmem:[%s9 + $0x1e0] sm:$0xff] %v2853
  %2982 = vst [vmem:[%s9 + $0x1e8] sm:$0xff] %v2854
  %2983 = vst [vmem:[%s9 + $0x1f0] sm:$0xff] %v2855
  %2984 = vst [vmem:[%s9 + $0x1f8] sm:$0xff] %v2856
  // Predicated region
  $region38: #{autoencoder_forward.1} parent=0 // pred_check
    _
  $region39: #{autoencoder_forward.1} parent=0 // pred_check_branch
    %2986 = sbr.rel (0) target = $region41
  $region40: #{autoencoder_forward.1} parent=0 // pred_region
    _
  $region41: #{autoencoder_forward.1} parent=0 // pred_fallthru
    _
  // Predicated region
  $region42: #{autoencoder_forward.1} parent=0 // pred_check
    _
  $region43: #{autoencoder_forward.1} parent=0 // pred_check_branch
    %2988 = sbr.rel (0) target = $region45
  $region44: #{autoencoder_forward.1} parent=0 // pred_region
    _
  $region45: #{autoencoder_forward.1} parent=0 // pred_fallthru
    _
  // Predicated region
  $region46: #{autoencoder_forward.1} parent=0 // pred_check
    _
  $region47: #{autoencoder_forward.1} parent=0 // pred_check_branch
    %2990 = sbr.rel (0) target = $region49
  $region48: #{autoencoder_forward.1} parent=0 // pred_region
    _
  $region49: #{autoencoder_forward.1} parent=0 // pred_fallthru
    _
  // Predicated region
  $region50: #{autoencoder_forward.1} parent=0 // pred_check
    _
  $region51: #{autoencoder_forward.1} parent=0 // pred_check_branch
    %2992 = sbr.rel (0) target = $region53
  $region52: #{autoencoder_forward.1} parent=0 // pred_region
    _
  $region53: #{autoencoder_forward.1} parent=0 // pred_fallthru
    _

</llo_original>
